<compile_context>
chip_gen: v6e
topology: v6e:2x2x1
jax: 0.10.0
libtpu: 0.0.40
codegen_flags: <defaults>
</compile_context>

<pallas_src>
import functools

import jax
import jax.numpy as jnp
import numpy as np
from jax import lax
from jax.experimental import pallas as pl
from jax.experimental.pallas import tpu as pltpu


def _round_up(x, m):
    return (x + m - 1) // m * m


# ------------------------------ Pallas kernel --------------------------------

def _gcn_kernel(h, ks,
                x_ref, br1_ref, bpr1_ref, ml1_ref, bpl1_ref,
                mr2_ref, br2b_ref, bl2_ref, bl2b_ref, o_ref):
    """Whole GcnBlock for one batch image, channel-minor ("channels folded
    into lanes") layout: four lane-dense MXU dots + one lane-dense store.

    Zero-halo columns / alignment rows of every canvas stay exactly zero via
    pre-masked bias planes (relu(0+0)=0), so no in-kernel masking is needed.
    All intermediates are plain values -- no VMEM scratch round trips."""
    f32 = jnp.float32
    bf16 = jnp.bfloat16

    x = x_ref[0]                                   # (hp2, CW) bf16

    # right branch conv1: (1,ks) W-conv -> one (hp2, CW) @ (CW, cout*w) dot.
    r1 = jnp.maximum(
        jnp.dot(x, br1_ref[...], preferred_element_type=f32) + bpr1_ref[...],
        0.0)                                       # (hp2, cout*w) f32

    # left branch conv1: (ks,1) H-conv -> ks shifted row windows concatenated
    # along lanes, one long-K dot (h, ks*CW) @ (ks*CW, cout*wc).
    xcat = jnp.concatenate([x[k:k + h, :] for k in range(ks)], axis=1)
    l1 = jnp.maximum(
        jnp.dot(xcat, ml1_ref[...], preferred_element_type=f32) + bpl1_ref[...],
        0.0)                                       # (h, cout*wc) f32

    # right branch conv2: (ks,1) H-conv on r1, same trick, K = ks*cout*w.
    r1b = r1.astype(bf16)
    rcat = jnp.concatenate([r1b[k:k + h, :] for k in range(ks)], axis=1)
    r2 = jnp.maximum(
        jnp.dot(rcat, mr2_ref[...], preferred_element_type=f32) + br2b_ref[...],
        0.0)                                       # (h, cout*w) f32

    # left branch conv2: (1,ks) W-conv -> one (h, cout*wc) @ (cout*wc, cout*w)
    # dot, fused with the final l + r add and one lane-dense store.
    l2 = jnp.maximum(
        jnp.dot(l1.astype(bf16), bl2_ref[...], preferred_element_type=f32)
        + bl2b_ref[...],
        0.0)                                       # (h, cout*w) f32

    o_ref[0] = (l2 + r2).astype(o_ref.dtype)


# --------------------------- operand preparation ------------------------------

def prepare_gcn_operands(params, cin, cout, h, w, ks):
    """Fold eval-mode BN into the conv weights and build the banded / per-tap
    block matrices and pre-masked bias planes.  Host-side, done once per
    weight set (hoisted out of the per-call path)."""
    p = ks // 2
    hp, wc, wr = h + 2 * p, w + 2 * p, w - 2 * p
    hp2 = _round_up(hp, 8)
    CW = _round_up(cin * wc, 128)                  # lane-padded slab width
    cw_o = cout * w

    def fold(name):
        wgt = np.asarray(params[name]['w'], np.float32)        # (o,i,kh,kw)
        scale, bias = (np.asarray(a, np.float32) for a in params[name]['sb'])
        o, i, kh, kw = wgt.shape
        return (wgt * scale[:, None, None, None]).reshape(o, i, kh * kw), bias

    wl1, bl1 = fold('l1')     # (cout, cin, ks)   H taps
    wl2, bl2 = fold('l2')     # (cout, cout, ks)  W taps
    wr1, br1 = fold('r1')     # (cout, cin, ks)   W taps
    wr2, br2 = fold('r2')     # (cout, cout, ks)  H taps

    # r1 W-conv: banded block matrix (CW, cout*w); valid cols land at [p,p+wr).
    br1_m = np.zeros((CW, cw_o), np.float32)
    for co in range(cout):
        for ci in range(cin):
            for v in range(p, p + wr):
                for k in range(ks):
                    br1_m[ci * wc + v + k, co * w + v] = wr1[co, ci, k]

    # l1 H-conv: per-tap channel-mix matrices stacked along K (ks*CW, cout*wc).
    ml1_m = np.zeros((ks * CW, cout * wc), np.float32)
    for k in range(ks):
        for co in range(cout):
            for ci in range(cin):
                for u in range(p, p + w):          # halo cols stay exactly 0
                    ml1_m[k * CW + ci * wc + u, co * wc + u] = wl1[co, ci, k]

    # r2 H-conv: per-tap channel-mix matrices stacked along K (ks*cw_o, cw_o).
    mr2_m = np.zeros((ks * cw_o, cw_o), np.float32)
    for k in range(ks):
        for co2 in range(cout):
            for co1 in range(cout):
                for v in range(w):
                    mr2_m[k * cw_o + co1 * w + v, co2 * w + v] = wr2[co2, co1, k]

    # l2 W-conv: banded block matrix (cout*wc, cout*w).
    bl2_m = np.zeros((cout * wc, cw_o), np.float32)
    for co2 in range(cout):
        for co1 in range(cout):
            for v in range(w):
                for k in range(ks):
                    bl2_m[co1 * wc + v + k, co2 * w + v] = wl2[co2, co1, k]

    # pre-masked bias planes: zero on halo columns and on the sublane
    # alignment rows hp..hp2-1 of the r1 canvas (keeps padding exactly zero).
    bpl1 = np.zeros((1, cout * wc), np.float32)
    for co in range(cout):
        bpl1[0, co * wc + p: co * wc + p + w] = bl1[co]

    bpr1 = np.zeros((hp2, cw_o), np.float32)
    for co in range(cout):
        bpr1[:hp, co * w + p: co * w + p + wr] = br1[co]

    bl2b = np.repeat(bl2, w)[None, :]              # (1, cout*w)
    br2b = np.repeat(br2, w)[None, :]

    bf16 = jnp.bfloat16
    return (jnp.asarray(br1_m, bf16), jnp.asarray(bpr1),
            jnp.asarray(ml1_m, bf16), jnp.asarray(bpl1),
            jnp.asarray(mr2_m, bf16), jnp.asarray(br2b),
            jnp.asarray(bl2_m, bf16), jnp.asarray(bl2b))


# ------------------------------- public wrapper --------------------------------

@functools.partial(jax.jit, static_argnames=("cin", "cout", "ks"))
def gcn_block(x_nchw, ops, *, cin, cout, ks):
    """GcnBlock.forward (exact PyTorch paddings), fused in one pallas_call."""
    n, _, h, w = x_nchw.shape
    p = ks // 2
    hp, wc = h + 2 * p, w + 2 * p
    hp2 = _round_up(hp, 8)
    CW = _round_up(cin * wc, 128)
    cw_o = cout * w

    # Zero-halo padded canvas, channel-minor along lanes: (n, hp2, cin*wc),
    # lane-padded to a multiple of 128.  ~1.4x the input, no im2col in HBM.
    xp = jnp.pad(x_nchw, ((0, 0), (0, 0), (p, p + hp2 - hp), (p, p)))
    x_cm = jnp.transpose(xp, (0, 2, 1, 3)).reshape(n, hp2, cin * wc)
    x_cm = jnp.pad(x_cm, ((0, 0), (0, 0), (0, CW - cin * wc))).astype(jnp.bfloat16)

    kernel = functools.partial(_gcn_kernel, h, ks)
    out = pl.pallas_call(
        kernel,
        out_shape=jax.ShapeDtypeStruct((n, h, cw_o), jnp.float32),
        grid=(n,),
        in_specs=[
            pl.BlockSpec((1, hp2, CW), lambda i: (i, 0, 0)),       # x slab
            pl.BlockSpec((CW, cw_o), lambda i: (0, 0)),            # B_r1
            pl.BlockSpec((hp2, cw_o), lambda i: (0, 0)),           # bias r1
            pl.BlockSpec((ks * CW, cout * wc), lambda i: (0, 0)),  # M_l1
            pl.BlockSpec((1, cout * wc), lambda i: (0, 0)),        # bias l1
            pl.BlockSpec((ks * cw_o, cw_o), lambda i: (0, 0)),     # M_r2
            pl.BlockSpec((1, cw_o), lambda i: (0, 0)),             # bias r2
            pl.BlockSpec((cout * wc, cw_o), lambda i: (0, 0)),     # B_l2
            pl.BlockSpec((1, cw_o), lambda i: (0, 0)),             # bias l2
        ],
        out_specs=pl.BlockSpec((1, h, cw_o), lambda i: (i, 0, 0)),
        compiler_params=pltpu.CompilerParams(
            dimension_semantics=("parallel",)),
    )(x_cm, *ops)

    # lane-dense (n, h, cout*w) -> NCHW outside the kernel (cheap XLA transpose)
    return out.reshape(n, h, cout, w).transpose(0, 2, 1, 3).astype(x_nchw.dtype)


# --------------------------- deterministic params ------------------------------

def init_params(key, in_c, out_c, ks):
    keys = jax.random.split(key, 12)

    def conv_w(k, oc, ic, kh, kw):
        bound = 1.0 / np.sqrt(ic * kh * kw)
        return jax.random.uniform(k, (oc, ic, kh, kw), jnp.float32, -bound, bound)

    def bn(kg, kb, oc, eps=1e-5):
        gamma = jax.random.uniform(kg, (oc,), jnp.float32, 0.5, 1.5)
        beta = jax.random.uniform(kb, (oc,), jnp.float32, -0.5, 0.5)
        mean = jnp.zeros((oc,), jnp.float32)       # PyTorch-init running stats
        var = jnp.ones((oc,), jnp.float32)
        scale = gamma / jnp.sqrt(var + eps)
        bias = beta - mean * scale
        return scale, bias

    return {
        'l1': dict(w=conv_w(keys[0], out_c, in_c, ks, 1), sb=bn(keys[1], keys[2], out_c)),
        'l2': dict(w=conv_w(keys[3], out_c, out_c, 1, ks), sb=bn(keys[4], keys[5], out_c)),
        'r1': dict(w=conv_w(keys[6], out_c, in_c, 1, ks), sb=bn(keys[7], keys[8], out_c)),
        'r2': dict(w=conv_w(keys[9], out_c, out_c, ks, 1), sb=bn(keys[10], keys[11], out_c)),
    }


# --------------------------- pure-JAX references ------------------------------

def _ref_cna(x_nchw, weight, scale, bias, padding, op_dtype):
    # BN folded into the conv weights (same as the kernel); op_dtype=bfloat16
    # reproduces the kernel's bf16-operand / f32-accumulate arithmetic.
    wf = (weight * scale[:, None, None, None]).astype(op_dtype).astype(jnp.float32)
    xq = x_nchw.astype(op_dtype).astype(jnp.float32)
    y = lax.conv_general_dilated(
        xq, wf, window_strides=(1, 1),
        padding=[(padding[0], padding[0]), (padding[1], padding[1])],
        dimension_numbers=('NCHW', 'OIHW', 'NCHW'),
        precision=lax.Precision.HIGHEST)
    return jnp.maximum(y + bias[None, :, None, None], 0.0)


def _ref_gcn(x, params, ks, op_dtype=jnp.float32):
    p = ks // 2
    l = _ref_cna(x, params['l1']['w'], *params['l1']['sb'], (p, 0), op_dtype)
    l = _ref_cna(l, params['l2']['w'], *params['l2']['sb'], (0, p), op_dtype)
    r = _ref_cna(x, params['r1']['w'], *params['r1']['sb'], (p, 0), op_dtype)
    r = _ref_cna(r, params['r2']['w'], *params['r2']['sb'], (0, p), op_dtype)
    return l + r


# ---------------------------------- main --------------------------------------

if __name__ == "__main__":
    N, in_c, out_c, H, W, ks = 2, 4, 8, 16, 16, 7
    key = jax.random.PRNGKey(0)
    kx, kp = jax.random.split(key)
    x = jax.random.normal(kx, (N, in_c, H, W), jnp.float32)
    params = init_params(kp, in_c, out_c, ks)

    ops = prepare_gcn_operands(params, in_c, out_c, H, W, ks)   # once per weights
    out = gcn_block(x, ops, cin=in_c, cout=out_c, ks=ks)
    out = jax.block_until_ready(out)
    assert out.shape == (N, out_c, H, W)

    # Tight check against a reference using the same bf16 operands / f32 accum.
    ref_bf16 = _ref_gcn(x, params, ks, op_dtype=jnp.bfloat16)
    np.testing.assert_allclose(np.asarray(out), np.asarray(ref_bf16),
                               rtol=1e-2, atol=1e-2)
    # Loose sanity check against the exact f32 module semantics.
    ref_f32 = _ref_gcn(x, params, ks, op_dtype=jnp.float32)
    np.testing.assert_allclose(np.asarray(out), np.asarray(ref_f32),
                               rtol=1e-1, atol=1e-1)
    print("KERNEL_OK")
</pallas_src>

<mosaic_0001>
module attributes {stable_mosaic.version = 11 : i64} {
  func.func @_gcn_kernel(%arg0: i32, %arg1: memref<1x24x128xbf16, #tpu.memory_space<vmem>>, %arg2: memref<128x128xbf16, #tpu.memory_space<vmem>>, %arg3: memref<24x128xf32, #tpu.memory_space<vmem>>, %arg4: memref<896x176xbf16, #tpu.memory_space<vmem>>, %arg5: memref<1x176xf32, #tpu.memory_space<vmem>>, %arg6: memref<896x128xbf16, #tpu.memory_space<vmem>>, %arg7: memref<1x128xf32, #tpu.memory_space<vmem>>, %arg8: memref<176x128xbf16, #tpu.memory_space<vmem>>, %arg9: memref<1x128xf32, #tpu.memory_space<vmem>>, %arg10: memref<1x16x128xf32, #tpu.memory_space<vmem>>) attributes {dimension_semantics = [#tpu.dimension_semantics<parallel>], iteration_bounds = array<i64: 2>, scalar_prefetch = 0 : i64, scratch_operands = 0 : i64, tpu.core_type = #tpu.core_type<tc>, window_params = [{transform_indices = @transform_0, window_bounds = array<i64: 1, 24, 128>}, {pipeline_mode = #tpu.pipeline_mode<synchronous>, transform_indices = @transform_1, window_bounds = array<i64: 128, 128>}, {pipeline_mode = #tpu.pipeline_mode<synchronous>, transform_indices = @transform_2, window_bounds = array<i64: 24, 128>}, {pipeline_mode = #tpu.pipeline_mode<synchronous>, transform_indices = @transform_3, window_bounds = array<i64: 896, 176>}, {pipeline_mode = #tpu.pipeline_mode<synchronous>, transform_indices = @transform_4, window_bounds = array<i64: 1, 176>}, {pipeline_mode = #tpu.pipeline_mode<synchronous>, transform_indices = @transform_5, window_bounds = array<i64: 896, 128>}, {pipeline_mode = #tpu.pipeline_mode<synchronous>, transform_indices = @transform_6, window_bounds = array<i64: 1, 128>}, {pipeline_mode = #tpu.pipeline_mode<synchronous>, transform_indices = @transform_7, window_bounds = array<i64: 176, 128>}, {pipeline_mode = #tpu.pipeline_mode<synchronous>, transform_indices = @transform_8, window_bounds = array<i64: 1, 128>}, {transform_indices = @transform_9, window_bounds = array<i64: 1, 16, 128>}]} {
    %c0 = arith.constant 0 : index
    %c0_0 = arith.constant 0 : index
    %c0_1 = arith.constant 0 : index
    %0 = vector.load %arg1[%c0, %c0_0, %c0_1] : memref<1x24x128xbf16, #tpu.memory_space<vmem>>, vector<1x24x128xbf16>
    %1 = vector.shape_cast %0 : vector<1x24x128xbf16> to vector<24x128xbf16>
    %c0_2 = arith.constant 0 : index
    %c0_3 = arith.constant 0 : index
    %2 = vector.load %arg2[%c0_2, %c0_3] : memref<128x128xbf16, #tpu.memory_space<vmem>>, vector<128x128xbf16>
    %cst = arith.constant dense<0.000000e+00> : vector<24x128xf32>
    %3 = tpu.matmul %1, %2, %cst {dimension_numbers = #tpu.dot_dimension_numbers<[1], [0], [0], [1], [0, 0, 1, 1], [], []>} : vector<24x128xbf16>, vector<128x128xbf16>, vector<24x128xf32> -> vector<24x128xf32>
    %c0_4 = arith.constant 0 : index
    %c0_5 = arith.constant 0 : index
    %4 = vector.load %arg3[%c0_4, %c0_5] : memref<24x128xf32, #tpu.memory_space<vmem>>, vector<24x128xf32>
    %5 = arith.addf %3, %4 : vector<24x128xf32>
    %cst_6 = arith.constant 0.000000e+00 : f32
    %6 = vector.broadcast %cst_6 : f32 to vector<24x128xf32>
    %7 = arith.maximumf %5, %6 : vector<24x128xf32>
    %8 = vector.extract_strided_slice %1 {offsets = [0, 0], sizes = [16, 128], strides = [1, 1]} : vector<24x128xbf16> to vector<16x128xbf16>
    %9 = vector.extract_strided_slice %1 {offsets = [1, 0], sizes = [16, 128], strides = [1, 1]} : vector<24x128xbf16> to vector<16x128xbf16>
    %10 = vector.extract_strided_slice %1 {offsets = [2, 0], sizes = [16, 128], strides = [1, 1]} : vector<24x128xbf16> to vector<16x128xbf16>
    %11 = vector.extract_strided_slice %1 {offsets = [3, 0], sizes = [16, 128], strides = [1, 1]} : vector<24x128xbf16> to vector<16x128xbf16>
    %12 = vector.extract_strided_slice %1 {offsets = [4, 0], sizes = [16, 128], strides = [1, 1]} : vector<24x128xbf16> to vector<16x128xbf16>
    %13 = vector.extract_strided_slice %1 {offsets = [5, 0], sizes = [16, 128], strides = [1, 1]} : vector<24x128xbf16> to vector<16x128xbf16>
    %14 = vector.extract_strided_slice %1 {offsets = [6, 0], sizes = [16, 128], strides = [1, 1]} : vector<24x128xbf16> to vector<16x128xbf16>
    %15 = tpu.concatenate %8, %9, %10, %11, %12, %13, %14 in 1 : vector<16x128xbf16>, vector<16x128xbf16>, vector<16x128xbf16>, vector<16x128xbf16>, vector<16x128xbf16>, vector<16x128xbf16>, vector<16x128xbf16> -> vector<16x896xbf16>
    %c0_7 = arith.constant 0 : index
    %c0_8 = arith.constant 0 : index
    %16 = vector.load %arg4[%c0_7, %c0_8] : memref<896x176xbf16, #tpu.memory_space<vmem>>, vector<896x176xbf16>
    %cst_9 = arith.constant dense<0.000000e+00> : vector<16x176xf32>
    %17 = tpu.matmul %15, %16, %cst_9 {dimension_numbers = #tpu.dot_dimension_numbers<[1], [0], [0], [1], [0, 0, 1, 1], [], []>} : vector<16x896xbf16>, vector<896x176xbf16>, vector<16x176xf32> -> vector<16x176xf32>
    %c0_10 = arith.constant 0 : index
    %c0_11 = arith.constant 0 : index
    %18 = vector.load %arg5[%c0_10, %c0_11] : memref<1x176xf32, #tpu.memory_space<vmem>>, vector<1x176xf32>
    %19 = vector.broadcast %18 : vector<1x176xf32> to vector<16x176xf32>
    %20 = arith.addf %17, %19 : vector<16x176xf32>
    %cst_12 = arith.constant 0.000000e+00 : f32
    %21 = vector.broadcast %cst_12 : f32 to vector<16x176xf32>
    %22 = arith.maximumf %20, %21 : vector<16x176xf32>
    %23 = arith.truncf %7 : vector<24x128xf32> to vector<24x128xbf16>
    %24 = vector.extract_strided_slice %23 {offsets = [0, 0], sizes = [16, 128], strides = [1, 1]} : vector<24x128xbf16> to vector<16x128xbf16>
    %25 = vector.extract_strided_slice %23 {offsets = [1, 0], sizes = [16, 128], strides = [1, 1]} : vector<24x128xbf16> to vector<16x128xbf16>
    %26 = vector.extract_strided_slice %23 {offsets = [2, 0], sizes = [16, 128], strides = [1, 1]} : vector<24x128xbf16> to vector<16x128xbf16>
    %27 = vector.extract_strided_slice %23 {offsets = [3, 0], sizes = [16, 128], strides = [1, 1]} : vector<24x128xbf16> to vector<16x128xbf16>
    %28 = vector.extract_strided_slice %23 {offsets = [4, 0], sizes = [16, 128], strides = [1, 1]} : vector<24x128xbf16> to vector<16x128xbf16>
    %29 = vector.extract_strided_slice %23 {offsets = [5, 0], sizes = [16, 128], strides = [1, 1]} : vector<24x128xbf16> to vector<16x128xbf16>
    %30 = vector.extract_strided_slice %23 {offsets = [6, 0], sizes = [16, 128], strides = [1, 1]} : vector<24x128xbf16> to vector<16x128xbf16>
    %31 = tpu.concatenate %24, %25, %26, %27, %28, %29, %30 in 1 : vector<16x128xbf16>, vector<16x128xbf16>, vector<16x128xbf16>, vector<16x128xbf16>, vector<16x128xbf16>, vector<16x128xbf16>, vector<16x128xbf16> -> vector<16x896xbf16>
    %c0_13 = arith.constant 0 : index
    %c0_14 = arith.constant 0 : index
    %32 = vector.load %arg6[%c0_13, %c0_14] : memref<896x128xbf16, #tpu.memory_space<vmem>>, vector<896x128xbf16>
    %cst_15 = arith.constant dense<0.000000e+00> : vector<16x128xf32>
    %33 = tpu.matmul %31, %32, %cst_15 {dimension_numbers = #tpu.dot_dimension_numbers<[1], [0], [0], [1], [0, 0, 1, 1], [], []>} : vector<16x896xbf16>, vector<896x128xbf16>, vector<16x128xf32> -> vector<16x128xf32>
    %c0_16 = arith.constant 0 : index
    %c0_17 = arith.constant 0 : index
    %34 = vector.load %arg7[%c0_16, %c0_17] : memref<1x128xf32, #tpu.memory_space<vmem>>, vector<1x128xf32>
    %35 = vector.broadcast %34 : vector<1x128xf32> to vector<16x128xf32>
    %36 = arith.addf %33, %35 : vector<16x128xf32>
    %cst_18 = arith.constant 0.000000e+00 : f32
    %37 = vector.broadcast %cst_18 : f32 to vector<16x128xf32>
    %38 = arith.maximumf %36, %37 : vector<16x128xf32>
    %39 = arith.truncf %22 : vector<16x176xf32> to vector<16x176xbf16>
    %c0_19 = arith.constant 0 : index
    %c0_20 = arith.constant 0 : index
    %40 = vector.load %arg8[%c0_19, %c0_20] : memref<176x128xbf16, #tpu.memory_space<vmem>>, vector<176x128xbf16>
    %cst_21 = arith.constant dense<0.000000e+00> : vector<16x128xf32>
    %41 = tpu.matmul %39, %40, %cst_21 {dimension_numbers = #tpu.dot_dimension_numbers<[1], [0], [0], [1], [0, 0, 1, 1], [], []>} : vector<16x176xbf16>, vector<176x128xbf16>, vector<16x128xf32> -> vector<16x128xf32>
    %c0_22 = arith.constant 0 : index
    %c0_23 = arith.constant 0 : index
    %42 = vector.load %arg9[%c0_22, %c0_23] : memref<1x128xf32, #tpu.memory_space<vmem>>, vector<1x128xf32>
    %43 = vector.broadcast %42 : vector<1x128xf32> to vector<16x128xf32>
    %44 = arith.addf %41, %43 : vector<16x128xf32>
    %cst_24 = arith.constant 0.000000e+00 : f32
    %45 = vector.broadcast %cst_24 : f32 to vector<16x128xf32>
    %46 = arith.maximumf %44, %45 : vector<16x128xf32>
    %47 = arith.addf %46, %38 : vector<16x128xf32>
    %c0_25 = arith.constant 0 : index
    %c0_26 = arith.constant 0 : index
    %c0_27 = arith.constant 0 : index
    %48 = vector.load %arg10[%c0_25, %c0_26, %c0_27] : memref<1x16x128xf32, #tpu.memory_space<vmem>>, vector<1x16x128xf32>
    %49 = vector.shape_cast %48 : vector<1x16x128xf32> to vector<16x128xf32>
    %50 = vector.shape_cast %47 : vector<16x128xf32> to vector<1x16x128xf32>
    tpu.vector_store %arg10[%c0_25, %c0_26, %c0_27], %50 {strides = array<i32>} : memref<1x16x128xf32, #tpu.memory_space<vmem>>, vector<1x16x128xf32>,
    return
  }
  func.func @transform_0(%arg0: i32) -> (i32, i32, i32) {
    %c0_i32 = arith.constant 0 : i32
    %c0_i32_0 = arith.constant 0 : i32
    %c0_i32_1 = arith.constant 0 : i32
    return %arg0, %c0_i32, %c0_i32_0 : i32, i32, i32
  }
  func.func @transform_1(%arg0: i32) -> (i32, i32) {
    %c0_i32 = arith.constant 0 : i32
    %c0_i32_0 = arith.constant 0 : i32
    %c0_i32_1 = arith.constant 0 : i32
    return %c0_i32, %c0_i32_0 : i32, i32
  }
  func.func @transform_2(%arg0: i32) -> (i32, i32) {
    %c0_i32 = arith.constant 0 : i32
    %c0_i32_0 = arith.constant 0 : i32
    %c0_i32_1 = arith.constant 0 : i32
    return %c0_i32, %c0_i32_0 : i32, i32
  }
  func.func @transform_3(%arg0: i32) -> (i32, i32) {
    %c0_i32 = arith.constant 0 : i32
    %c0_i32_0 = arith.constant 0 : i32
    %c0_i32_1 = arith.constant 0 : i32
    return %c0_i32, %c0_i32_0 : i32, i32
  }
  func.func @transform_4(%arg0: i32) -> (i32, i32) {
    %c0_i32 = arith.constant 0 : i32
    %c0_i32_0 = arith.constant 0 : i32
    %c0_i32_1 = arith.constant 0 : i32
    return %c0_i32, %c0_i32_0 : i32, i32
  }
  func.func @transform_5(%arg0: i32) -> (i32, i32) {
    %c0_i32 = arith.constant 0 : i32
    %c0_i32_0 = arith.constant 0 : i32
    %c0_i32_1 = arith.constant 0 : i32
    return %c0_i32, %c0_i32_0 : i32, i32
  }
  func.func @transform_6(%arg0: i32) -> (i32, i32) {
    %c0_i32 = arith.constant 0 : i32
    %c0_i32_0 = arith.constant 0 : i32
    %c0_i32_1 = arith.constant 0 : i32
    return %c0_i32, %c0_i32_0 : i32, i32
  }
  func.func @transform_7(%arg0: i32) -> (i32, i32) {
    %c0_i32 = arith.constant 0 : i32
    %c0_i32_0 = arith.constant 0 : i32
    %c0_i32_1 = arith.constant 0 : i32
    return %c0_i32, %c0_i32_0 : i32, i32
  }
  func.func @transform_8(%arg0: i32) -> (i32, i32) {
    %c0_i32 = arith.constant 0 : i32
    %c0_i32_0 = arith.constant 0 : i32
    %c0_i32_1 = arith.constant 0 : i32
    return %c0_i32, %c0_i32_0 : i32, i32
  }
  func.func @transform_9(%arg0: i32) -> (i32, i32, i32) {
    %c0_i32 = arith.constant 0 : i32
    %c0_i32_0 = arith.constant 0 : i32
    %c0_i32_1 = arith.constant 0 : i32
    return %arg0, %c0_i32, %c0_i32_0 : i32, i32, i32
  }
}

</mosaic_0001>

<llo_original>
// kernel: gcn_block.1
$region0: #{gcn_block.1}
  #allocation0 [shape = 'u32[]', space=smem, size = 0x4, offset = 0x4, fixed_abs, tag = 'smem constant byte address 0x4 - core index']
  #allocation1 [shape = 'u32[144,128]{1,0:T(1,128)}', space=vmem, size = 0x12000, scoped, tag = 'internal scratch']
  %s0 = inlined_call_operand.vmem [shape: bf16[2,24,128], index: 0, kind: input, shape index: {}]
  %s1 = inlined_call_operand.vmem [shape: bf16[128,128], index: 1, kind: input, shape index: {}]
  %s2 = inlined_call_operand.vmem [shape: f32[24,128], index: 2, kind: input, shape index: {}]
  %s3 = inlined_call_operand.vmem [shape: bf16[896,176], index: 3, kind: input, shape index: {}]
  %s4 = inlined_call_operand.vmem [shape: f32[1,176], index: 4, kind: input, shape index: {}]
  %s5 = inlined_call_operand.vmem [shape: bf16[896,128], index: 5, kind: input, shape index: {}]
  %s6 = inlined_call_operand.vmem [shape: f32[1,128], index: 6, kind: input, shape index: {}]
  %s7 = inlined_call_operand.vmem [shape: bf16[176,128], index: 7, kind: input, shape index: {}]
  %s8 = inlined_call_operand.vmem [shape: f32[1,128], index: 8, kind: input, shape index: {}]
  %s9 = inlined_call_operand.vmem [shape: f32[2,16,128], index: 9, kind: output, shape index: {}]
  %s10 = sld [smem:[#allocation0]]
  $region69: #{gcn_block.1} parent=0
    _
  %s12 = ssub.s32 1, %s10
  %s13 = scalar_select 0, %s12, %s10
  loop: start=0, step=1, limit=4
  $region2: #{gcn_block.1} parent=0 // loop_pre_header
    _
  $region3: #{gcn_block.1} parent=0 // loop_header
    %s15 = sphi 0, %s19
    %p16 = scmp.ge.s32.totalorder %s15, 4
    %s25 = sphi 0, %s27
    %s28 = sphi 0, %s25
    %s29 = sphi 0, %s28
    %s45 = sphi 0, %s29
    %s49 = sphi 0, %s49
    %s51 = sphi 0, %s49
    %s52 = sphi 0, %s51
    %s66 = sphi 0, %s52
    %s70 = sphi 0, %s70
    %s72 = sphi 0, %s70
    %s73 = sphi 0, %s72
    %s87 = sphi 0, %s73
    %s91 = sphi 0, %s91
    %s93 = sphi 0, %s91
    %s94 = sphi 0, %s93
    %s108 = sphi 0, %s94
    %s112 = sphi 0, %s112
    %s114 = sphi 0, %s112
    %s115 = sphi 0, %s114
    %s129 = sphi 0, %s115
    %s133 = sphi 0, %s133
    %s135 = sphi 0, %s133
    %s136 = sphi 0, %s135
    %s150 = sphi 0, %s136
    %s154 = sphi 0, %s154
    %s156 = sphi 0, %s154
    %s157 = sphi 0, %s156
    %s171 = sphi 0, %s157
    %s175 = sphi 0, %s175
    %s177 = sphi 0, %s175
    %s178 = sphi 0, %s177
    %s192 = sphi 0, %s178
    %s196 = sphi 0, %s196
    %s198 = sphi 0, %s196
    %s199 = sphi 0, %s198
    %s213 = sphi 0, %s199
    %s219 = sphi 0, %s221
    %s222 = sphi 0, %s219
    %s223 = sphi 0, %s222
    %s239 = sphi 0, %s223
  $region4: #{gcn_block.1} parent=0 // loop_header_branch
    %18 = sbr.rel (%p16) target = $region8
  $region5: #{gcn_block.1} parent=0 // loop_body
    %s20 = ssub.s32 %s15, 1
    %s21 = ssub.s32 %s15, 2
    %s22 = sadd.s32 %s15, 1
    %s23 = ssub.s32 %s15, %s22
    %p24 = scmp.eq.s32.totalorder %s23, 0
    %s26 = sadd.s32 %s25, 1
    %s27 = scalar_select %p24, %s25, %s26
    %p30 = pneg %p24
    %p31 = scmp.eq.s32.totalorder %s15, 1
    %p32 = por %p30, %p31
    %p33 = scmp.ne.s32.totalorder %s25, %s28
    %p34 = scmp.eq.s32.totalorder %s15, 0
    %p35 = por %p33, %p34
    %p36 = scmp.ne.s32.totalorder %s25, %s28
    %p37 = scmp.eq.s32.totalorder %s20, 1
    %p38 = por %p36, %p37
    %p39 = scmp.ne.s32.totalorder %s28, %s29
    %p40 = scmp.eq.s32.totalorder %s20, 0
    %p41 = por %p39, %p40
    %p42 = scmp.ne.s32.totalorder %s28, %s29
    %p43 = scmp.eq.s32.totalorder %s21, 1
    %p44 = por %p42, %p43
    %p46 = scmp.ne.s32.totalorder %s29, %s45
    %p47 = scmp.eq.s32.totalorder %s21, 0
    %p48 = por %p46, %p47
    %s50 = sadd.s32 %s49, 1
    %p53 = scmp.eq.s32.totalorder %s15, 1
    %p54 = scmp.ne.s32.totalorder %s49, %s51
    %p55 = scmp.eq.s32.totalorder %s15, 0
    %p56 = por %p54, %p55
    %p57 = scmp.ne.s32.totalorder %s49, %s51
    %p58 = scmp.eq.s32.totalorder %s20, 1
    %p59 = por %p57, %p58
    %p60 = scmp.ne.s32.totalorder %s51, %s52
    %p61 = scmp.eq.s32.totalorder %s20, 0
    %p62 = por %p60, %p61
    %p63 = scmp.ne.s32.totalorder %s51, %s52
    %p64 = scmp.eq.s32.totalorder %s21, 1
    %p65 = por %p63, %p64
    %p67 = scmp.ne.s32.totalorder %s52, %s66
    %p68 = scmp.eq.s32.totalorder %s21, 0
    %p69 = por %p67, %p68
    %s71 = sadd.s32 %s70, 1
    %p74 = scmp.eq.s32.totalorder %s15, 1
    %p75 = scmp.ne.s32.totalorder %s70, %s72
    %p76 = scmp.eq.s32.totalorder %s15, 0
    %p77 = por %p75, %p76
    %p78 = scmp.ne.s32.totalorder %s70, %s72
    %p79 = scmp.eq.s32.totalorder %s20, 1
    %p80 = por %p78, %p79
    %p81 = scmp.ne.s32.totalorder %s72, %s73
    %p82 = scmp.eq.s32.totalorder %s20, 0
    %p83 = por %p81, %p82
    %p84 = scmp.ne.s32.totalorder %s72, %s73
    %p85 = scmp.eq.s32.totalorder %s21, 1
    %p86 = por %p84, %p85
    %p88 = scmp.ne.s32.totalorder %s73, %s87
    %p89 = scmp.eq.s32.totalorder %s21, 0
    %p90 = por %p88, %p89
    %s92 = sadd.s32 %s91, 1
    %p95 = scmp.eq.s32.totalorder %s15, 1
    %p96 = scmp.ne.s32.totalorder %s91, %s93
    %p97 = scmp.eq.s32.totalorder %s15, 0
    %p98 = por %p96, %p97
    %p99 = scmp.ne.s32.totalorder %s91, %s93
    %p100 = scmp.eq.s32.totalorder %s20, 1
    %p101 = por %p99, %p100
    %p102 = scmp.ne.s32.totalorder %s93, %s94
    %p103 = scmp.eq.s32.totalorder %s20, 0
    %p104 = por %p102, %p103
    %p105 = scmp.ne.s32.totalorder %s93, %s94
    %p106 = scmp.eq.s32.totalorder %s21, 1
    %p107 = por %p105, %p106
    %p109 = scmp.ne.s32.totalorder %s94, %s108
    %p110 = scmp.eq.s32.totalorder %s21, 0
    %p111 = por %p109, %p110
    %s113 = sadd.s32 %s112, 1
    %p116 = scmp.eq.s32.totalorder %s15, 1
    %p117 = scmp.ne.s32.totalorder %s112, %s114
    %p118 = scmp.eq.s32.totalorder %s15, 0
    %p119 = por %p117, %p118
    %p120 = scmp.ne.s32.totalorder %s112, %s114
    %p121 = scmp.eq.s32.totalorder %s20, 1
    %p122 = por %p120, %p121
    %p123 = scmp.ne.s32.totalorder %s114, %s115
    %p124 = scmp.eq.s32.totalorder %s20, 0
    %p125 = por %p123, %p124
    %p126 = scmp.ne.s32.totalorder %s114, %s115
    %p127 = scmp.eq.s32.totalorder %s21, 1
    %p128 = por %p126, %p127
    %p130 = scmp.ne.s32.totalorder %s115, %s129
    %p131 = scmp.eq.s32.totalorder %s21, 0
    %p132 = por %p130, %p131
    %s134 = sadd.s32 %s133, 1
    %p137 = scmp.eq.s32.totalorder %s15, 1
    %p138 = scmp.ne.s32.totalorder %s133, %s135
    %p139 = scmp.eq.s32.totalorder %s15, 0
    %p140 = por %p138, %p139
    %p141 = scmp.ne.s32.totalorder %s133, %s135
    %p142 = scmp.eq.s32.totalorder %s20, 1
    %p143 = por %p141, %p142
    %p144 = scmp.ne.s32.totalorder %s135, %s136
    %p145 = scmp.eq.s32.totalorder %s20, 0
    %p146 = por %p144, %p145
    %p147 = scmp.ne.s32.totalorder %s135, %s136
    %p148 = scmp.eq.s32.totalorder %s21, 1
    %p149 = por %p147, %p148
    %p151 = scmp.ne.s32.totalorder %s136, %s150
    %p152 = scmp.eq.s32.totalorder %s21, 0
    %p153 = por %p151, %p152
    %s155 = sadd.s32 %s154, 1
    %p158 = scmp.eq.s32.totalorder %s15, 1
    %p159 = scmp.ne.s32.totalorder %s154, %s156
    %p160 = scmp.eq.s32.totalorder %s15, 0
    %p161 = por %p159, %p160
    %p162 = scmp.ne.s32.totalorder %s154, %s156
    %p163 = scmp.eq.s32.totalorder %s20, 1
    %p164 = por %p162, %p163
    %p165 = scmp.ne.s32.totalorder %s156, %s157
    %p166 = scmp.eq.s32.totalorder %s20, 0
    %p167 = por %p165, %p166
    %p168 = scmp.ne.s32.totalorder %s156, %s157
    %p169 = scmp.eq.s32.totalorder %s21, 1
    %p170 = por %p168, %p169
    %p172 = scmp.ne.s32.totalorder %s157, %s171
    %p173 = scmp.eq.s32.totalorder %s21, 0
    %p174 = por %p172, %p173
    %s176 = sadd.s32 %s175, 1
    %p179 = scmp.eq.s32.totalorder %s15, 1
    %p180 = scmp.ne.s32.totalorder %s175, %s177
    %p181 = scmp.eq.s32.totalorder %s15, 0
    %p182 = por %p180, %p181
    %p183 = scmp.ne.s32.totalorder %s175, %s177
    %p184 = scmp.eq.s32.totalorder %s20, 1
    %p185 = por %p183, %p184
    %p186 = scmp.ne.s32.totalorder %s177, %s178
    %p187 = scmp.eq.s32.totalorder %s20, 0
    %p188 = por %p186, %p187
    %p189 = scmp.ne.s32.totalorder %s177, %s178
    %p190 = scmp.eq.s32.totalorder %s21, 1
    %p191 = por %p189, %p190
    %p193 = scmp.ne.s32.totalorder %s178, %s192
    %p194 = scmp.eq.s32.totalorder %s21, 0
    %p195 = por %p193, %p194
    %s197 = sadd.s32 %s196, 1
    %p200 = scmp.eq.s32.totalorder %s15, 1
    %p201 = scmp.ne.s32.totalorder %s196, %s198
    %p202 = scmp.eq.s32.totalorder %s15, 0
    %p203 = por %p201, %p202
    %p204 = scmp.ne.s32.totalorder %s196, %s198
    %p205 = scmp.eq.s32.totalorder %s20, 1
    %p206 = por %p204, %p205
    %p207 = scmp.ne.s32.totalorder %s198, %s199
    %p208 = scmp.eq.s32.totalorder %s20, 0
    %p209 = por %p207, %p208
    %p210 = scmp.ne.s32.totalorder %s198, %s199
    %p211 = scmp.eq.s32.totalorder %s21, 1
    %p212 = por %p210, %p211
    %p214 = scmp.ne.s32.totalorder %s199, %s213
    %p215 = scmp.eq.s32.totalorder %s21, 0
    %p216 = por %p214, %p215
    %s217 = ssub.s32 %s15, %s22
    %p218 = scmp.eq.s32.totalorder %s217, 0
    %s220 = sadd.s32 %s219, 1
    %s221 = scalar_select %p218, %s219, %s220
    %p224 = pneg %p218
    %p225 = scmp.eq.s32.totalorder %s15, 1
    %p226 = por %p224, %p225
    %p227 = scmp.ne.s32.totalorder %s219, %s222
    %p228 = scmp.eq.s32.totalorder %s15, 0
    %p229 = por %p227, %p228
    %p230 = scmp.ne.s32.totalorder %s219, %s222
    %p231 = scmp.eq.s32.totalorder %s20, 1
    %p232 = por %p230, %p231
    %p233 = scmp.ne.s32.totalorder %s222, %s223
    %p234 = scmp.eq.s32.totalorder %s20, 0
    %p235 = por %p233, %p234
    %p236 = scmp.ne.s32.totalorder %s222, %s223
    %p237 = scmp.eq.s32.totalorder %s21, 1
    %p238 = por %p236, %p237
    %p240 = scmp.ne.s32.totalorder %s223, %s239
    %p241 = scmp.eq.s32.totalorder %s21, 0
    %p242 = por %p240, %p241
    %p243 = scmp.le.s32.totalorder 1, %s15
    %p244 = scmp.lt.s32.totalorder %s15, 3
    %p245 = pnand %p243, %p244
    %p246 = pneg %p245
    // Predicated region
    $region9: #{gcn_block.1} parent=5 // pred_check
      _
    $region10: #{gcn_block.1} parent=5 // pred_check_branch
      %248 = sbr.rel (%p245) target = $region12
    $region11: #{gcn_block.1} parent=5 // pred_region
      %s249 = ssub.s32 %s15, 1
      // Predicated region
      $region13: #{gcn_block.1} parent=11 // pred_check
        %p250 = pneg %p62
      $region14: #{gcn_block.1} parent=11 // pred_check_branch
        %252 = sbr.rel (%p250) target = $region16
      $region15: #{gcn_block.1} parent=11 // pred_region
        _
      $region16: #{gcn_block.1} parent=11 // pred_fallthru
        _
      // Predicated region
      $region17: #{gcn_block.1} parent=11 // pred_check
        %p253 = pneg %p83
      $region18: #{gcn_block.1} parent=11 // pred_check_branch
        %255 = sbr.rel (%p253) target = $region20
      $region19: #{gcn_block.1} parent=11 // pred_region
        _
      $region20: #{gcn_block.1} parent=11 // pred_fallthru
        _
      // Predicated region
      $region21: #{gcn_block.1} parent=11 // pred_check
        %p256 = pneg %p104
      $region22: #{gcn_block.1} parent=11 // pred_check_branch
        %258 = sbr.rel (%p256) target = $region24
      $region23: #{gcn_block.1} parent=11 // pred_region
        _
      $region24: #{gcn_block.1} parent=11 // pred_fallthru
        _
      // Predicated region
      $region25: #{gcn_block.1} parent=11 // pred_check
        %p259 = pneg %p125
      $region26: #{gcn_block.1} parent=11 // pred_check_branch
        %261 = sbr.rel (%p259) target = $region28
      $region27: #{gcn_block.1} parent=11 // pred_region
        _
      $region28: #{gcn_block.1} parent=11 // pred_fallthru
        _
      // Predicated region
      $region29: #{gcn_block.1} parent=11 // pred_check
        %p262 = pneg %p146
      $region30: #{gcn_block.1} parent=11 // pred_check_branch
        %264 = sbr.rel (%p262) target = $region32
      $region31: #{gcn_block.1} parent=11 // pred_region
        _
      $region32: #{gcn_block.1} parent=11 // pred_fallthru
        _
      // Predicated region
      $region33: #{gcn_block.1} parent=11 // pred_check
        %p265 = pneg %p167
      $region34: #{gcn_block.1} parent=11 // pred_check_branch
        %267 = sbr.rel (%p265) target = $region36
      $region35: #{gcn_block.1} parent=11 // pred_region
        _
      $region36: #{gcn_block.1} parent=11 // pred_fallthru
        _
      // Predicated region
      $region37: #{gcn_block.1} parent=11 // pred_check
        %p268 = pneg %p188
      $region38: #{gcn_block.1} parent=11 // pred_check_branch
        %270 = sbr.rel (%p268) target = $region40
      $region39: #{gcn_block.1} parent=11 // pred_region
        _
      $region40: #{gcn_block.1} parent=11 // pred_fallthru
        _
      // Predicated region
      $region41: #{gcn_block.1} parent=11 // pred_check
        %p271 = pneg %p209
      $region42: #{gcn_block.1} parent=11 // pred_check_branch
        %273 = sbr.rel (%p271) target = $region44
      $region43: #{gcn_block.1} parent=11 // pred_region
        _
      $region44: #{gcn_block.1} parent=11 // pred_fallthru
        _
    $region12: #{gcn_block.1} parent=5 // pred_fallthru
      _
    %p274 = scmp.lt.s32.totalorder %s15, 2
    // Predicated region
    $region45: #{gcn_block.1} parent=5 // pred_check
      %p275 = pneg %p274
    $region46: #{gcn_block.1} parent=5 // pred_check_branch
      %277 = sbr.rel (%p275) target = $region48
    $region47: #{gcn_block.1} parent=5 // pred_region
      // Predicated region
      $region49: #{gcn_block.1} parent=47 // pred_check
        %p278 = pneg %p35
      $region50: #{gcn_block.1} parent=47 // pred_check_branch
        %280 = sbr.rel (%p278) target = $region52
      $region51: #{gcn_block.1} parent=47 // pred_region
        %p281 = scmp.lt.s32.totalorder %s15, 1
        %s282 = scalar_select %p281, %s15, 1
        %s283 = smul.addr %s282, 3
        %s284 = smul.addr %s283, 4
        %s285 = scalar_lea.vmem %s0, %s284
      $region52: #{gcn_block.1} parent=47 // pred_fallthru
        _
    $region48: #{gcn_block.1} parent=5 // pred_fallthru
      _
    %p286 = scmp.le.s32.totalorder 1, %s15
    %p287 = scmp.lt.s32.totalorder %s15, 3
    %p288 = pnand %p286, %p287
    %p289 = pneg %p288
    // Predicated region
    $region53: #{gcn_block.1} parent=5 // pred_check
      _
    $region54: #{gcn_block.1} parent=5 // pred_check_branch
      %291 = sbr.rel (%p288) target = $region56
    $region55: #{gcn_block.1} parent=5 // pred_region
      %s292 = ssub.s32 %s15, 1
      %p293 = scmp.lt.s32.totalorder %s20, 1
      %s294 = scalar_select %p293, %s20, 1
      %s295 = smul.addr %s294, 3
      %s296 = smul.addr %s295, 4
      %s297 = scalar_lea.vmem %s0, %s296
      %p298 = pneg %p41
      %p299 = pneg %p38
      %p300 = pneg %p62
      %p301 = pneg %p59
      %p302 = pneg %p83
      %p303 = pneg %p80
      %p304 = pneg %p104
      %p305 = pneg %p101
      %p306 = pneg %p125
      %p307 = pneg %p122
      %p308 = pneg %p146
      %p309 = pneg %p143
      %p310 = pneg %p167
      %p311 = pneg %p164
      %p312 = pneg %p188
      %p313 = pneg %p185
      %p314 = pneg %p209
      %p315 = pneg %p206
      %p316 = pneg %p235
      %p317 = pneg %p232
      %p318 = scmp.lt.s32.totalorder %s20, 1
      %s319 = scalar_select %p318, %s20, 1
      %s320 = smul.addr %s319, 2
      %s321 = smul.addr %s320, 8
      %s322 = scalar_lea.vmem %s9, %s321
      %p323 = scmp.lt.s32.totalorder %s20, 1
      %s324 = scalar_select %p323, %s20, 1
      %s325 = smul.addr %s324, 3
      %s326 = smul.addr %s325, 4
      %s327 = scalar_lea.vmem %s0, %s326
      %p328 = scmp.lt.s32.totalorder %s20, 1
      %s329 = scalar_select %p328, %s20, 1
      %s330 = smul.addr %s329, 2
      %s331 = smul.addr %s330, 8
      %s332 = scalar_lea.vmem %s9, %s331
      %v334 = vld [vmem:[%s327] sm:$0xf]
      %v335 = vld [vmem:[%s327 + $0x4] sm:$0xf]
      %v336 = vld [vmem:[%s327 + $0x8] sm:$0xf]
      %v337 = vld [vmem:[%s1] sm:$0xf]
      %v338 = vld [vmem:[%s1 + $0x4] sm:$0xf]
      %v339 = vld [vmem:[%s1 + $0x8] sm:$0xf]
      %v340 = vld [vmem:[%s1 + $0xc] sm:$0xf]
      %v341 = vld [vmem:[%s1 + $0x10] sm:$0xf]
      %v342 = vld [vmem:[%s1 + $0x14] sm:$0xf]
      %v343 = vld [vmem:[%s1 + $0x18] sm:$0xf]
      %v344 = vld [vmem:[%s1 + $0x1c] sm:$0xf]
      %v345 = vld [vmem:[%s1 + $0x20] sm:$0xf]
      %v346 = vld [vmem:[%s1 + $0x24] sm:$0xf]
      %v347 = vld [vmem:[%s1 + $0x28] sm:$0xf]
      %v348 = vld [vmem:[%s1 + $0x2c] sm:$0xf]
      %v349 = vld [vmem:[%s1 + $0x30] sm:$0xf]
      %v350 = vld [vmem:[%s1 + $0x34] sm:$0xf]
      %v351 = vld [vmem:[%s1 + $0x38] sm:$0xf]
      %v352 = vld [vmem:[%s1 + $0x3c] sm:$0xf]
      %v353 = vld [vmem:[%s2] sm:$0xff]
      %v354 = vld [vmem:[%s2 + $0x8] sm:$0xff]
      %v355 = vld [vmem:[%s2 + $0x10] sm:$0xff]
      %v359 = vunpack.c.l.b16 %v334
      %v360 = vunpack.c.l.b16 %v335
      %v361 = vunpack.c.l.b16 %v336
      %v362 = vpack.c.b16 %v360, %v359
      %v363 = vpack.c.b16 %v361, %v361
      %v382 = vunpack.c.l.b16 %v337
      %v383 = vunpack.c.l.b16 %v338
      %v384 = vunpack.c.l.b16 %v339
      %v385 = vunpack.c.l.b16 %v340
      %v386 = vunpack.c.l.b16 %v341
      %v387 = vunpack.c.l.b16 %v342
      %v388 = vunpack.c.l.b16 %v343
      %v389 = vunpack.c.l.b16 %v344
      %v390 = vunpack.c.l.b16 %v345
      %v391 = vunpack.c.l.b16 %v346
      %v392 = vunpack.c.l.b16 %v347
      %v393 = vunpack.c.l.b16 %v348
      %v394 = vunpack.c.l.b16 %v349
      %v395 = vunpack.c.l.b16 %v350
      %v396 = vunpack.c.l.b16 %v351
      %v397 = vunpack.c.l.b16 %v352
      %v398 = vpack.c.b16 %v383, %v382
      %v399 = vpack.c.b16 %v385, %v384
      %v400 = vpack.c.b16 %v387, %v386
      %v401 = vpack.c.b16 %v389, %v388
      %v402 = vpack.c.b16 %v391, %v390
      %v403 = vpack.c.b16 %v393, %v392
      %v404 = vpack.c.b16 %v395, %v394
      %v405 = vpack.c.b16 %v397, %v396
      %414 = vmatprep.subr.bf16.mxu0 0
      %415 = vmatpush1.bf16.msra.mxu0 %v405
      %416 = vmatprep.subr.bf16.mxu0 0
      %417 = vmatpush1.bf16.msra.mxu0 %v404
      %418 = vmatprep.subr.bf16.mxu0 0
      %419 = vmatpush1.bf16.msra.mxu0 %v403
      %420 = vmatprep.subr.bf16.mxu0 0
      %421 = vmatpush1.bf16.msra.mxu0 %v402
      %422 = vmatprep.subr.bf16.mxu0 0
      %423 = vmatpush1.bf16.msra.mxu0 %v401
      %424 = vmatprep.subr.bf16.mxu0 0
      %425 = vmatpush1.bf16.msra.mxu0 %v400
      %426 = vmatprep.subr.bf16.mxu0 0
      %427 = vmatpush1.bf16.msra.mxu0 %v399
      %428 = vmatprep.subr.bf16.mxu0 0
      %429 = vmatpush1.bf16.msra.mxu0 %v398
      %430 = vmatprep.subr.bf16.mxu0 0
      %431 = vmatpush2.bf16.msra.mxu0 0
      %432 = vmatprep.subr.bf16.mxu0 0
      %433 = vmatpush2.bf16.msra.mxu0 0
      %434 = vmatprep.subr.bf16.mxu0 0
      %435 = vmatpush2.bf16.msra.mxu0 0
      %436 = vmatprep.subr.bf16.mxu0 0
      %437 = vmatpush2.bf16.msra.mxu0 0
      %438 = vmatprep.subr.bf16.mxu0 0
      %439 = vmatpush2.bf16.msra.mxu0 0
      %440 = vmatprep.subr.bf16.mxu0 0
      %441 = vmatpush2.bf16.msra.mxu0 0
      %442 = vmatprep.subr.bf16.mxu0 0
      %443 = vmatpush2.bf16.msra.mxu0 0
      %444 = vmatprep.subr.bf16.mxu0 0
      %445 = vmatpush2.bf16.msra.mxu0 0
      %446 = vmatprep.mubr.bf16.mxu0 0
      %447 = vmatmul.mubr.bf16.gmra.mxu0 %v362
      %v448 = vpop.f32.mrf.mxu0
      %v449 = vadd.f32 %v353, %v448
      %v450 = vpop.f32.mrf.mxu0
      %v451 = vpop.f32.mrf.mxu0
      %v452 = vadd.f32 %v354, %v451
      %v453 = vpop.f32.mrf.mxu0
      %454 = vmatprep.mubr.bf16.mxu0 0
      %455 = vmatmul.mubr.bf16.gmra.mxu0 %v363
      %v456 = vpop.f32.mrf.mxu0
      %v457 = vadd.f32 %v355, %v456
      %v458 = vpop.f32.mrf.mxu0
      %v459 = vpop.f32.mrf.mxu0
      %v460 = vpop.f32.mrf.mxu0
      %461 = vdwg.mxu0
      %v462 = vmax.f32 %v449, 0.0
      %v463 = vmax.f32 %v452, 0.0
      %v464 = vmax.f32 %v457, 0.0
      %vm465 = vsmask.f32 7424
      %v467 = vshrl.u32 %v362, 16
      %v469 = vshll.u32 %v362, 16
      %v471 = vrot.slane %v469, 1
      %v472 = vor.u32 %v467, %v471
      %v474 = vshll.u32 %v363, 16
      %v476 = vrot.slane %v474, 1
      %v477 = vsel %vm465, %v472, %v476
      %vm479 = vcmask 1046528
      %v480 = vrot.slane %v362, 1
      %v481 = vrot.slane %v363, 1
      %v482 = vsel %vm479, %v480, %v481
      %vm484 = vsmask.f32 6400
      %v485 = vrot.slane %v467, 1
      %v486 = vrot.slane %v469, 2
      %v487 = vor.u32 %v485, %v486
      %v488 = vshrl.u32 %v363, 16
      %v490 = vrot.slane %v488, 1
      %v491 = vrot.slane %v474, 2
      %v492 = vor.u32 %v490, %v491
      %v493 = vsel %vm484, %v487, %v492
      %vm495 = vcmask 1045504
      %v496 = vrot.slane %v362, 2
      %v497 = vrot.slane %v363, 2
      %v498 = vsel %vm495, %v496, %v497
      %vm500 = vsmask.f32 5376
      %v501 = vrot.slane %v467, 2
      %v502 = vrot.slane %v469, 3
      %v503 = vor.u32 %v501, %v502
      %v504 = vrot.slane %v488, 2
      %v505 = vrot.slane %v474, 3
      %v506 = vor.u32 %v504, %v505
      %v507 = vsel %vm500, %v503, %v506
      %vm509 = vcmask 1044480
      %v510 = vrot.slane %v362, 3
      %v511 = vrot.slane %v363, 3
      %v512 = vsel %vm509, %v510, %v511
      %v514 = vld [vmem:[%s3] sm:$0xff]
      %v515 = vld [vmem:[%s3 + $0x8] sm:$0xff]
      %v516 = vld [vmem:[%s3 + $0x10] sm:$0xff]
      %v517 = vld [vmem:[%s3 + $0x18] sm:$0xff]
      %v518 = vld [vmem:[%s3 + $0x20] sm:$0xff]
      %v519 = vld [vmem:[%s3 + $0x28] sm:$0xff]
      %v520 = vld [vmem:[%s3 + $0x30] sm:$0xff]
      %v521 = vld [vmem:[%s3 + $0x38] sm:$0xff]
      %v522 = vld [vmem:[%s3 + $0x40] sm:$0xff]
      %v523 = vld [vmem:[%s3 + $0x48] sm:$0xff]
      %v524 = vld [vmem:[%s3 + $0x50] sm:$0xff]
      %v525 = vld [vmem:[%s3 + $0x58] sm:$0xff]
      %v526 = vld [vmem:[%s3 + $0x60] sm:$0xff]
      %v527 = vld [vmem:[%s3 + $0x68] sm:$0xff]
      %v528 = vld [vmem:[%s3 + $0x70] sm:$0xff]
      %v529 = vld [vmem:[%s3 + $0x78] sm:$0xff]
      %v530 = vld [vmem:[%s3 + $0x80] sm:$0xff]
      %v531 = vld [vmem:[%s3 + $0x88] sm:$0xff]
      %v532 = vld [vmem:[%s3 + $0x90] sm:$0xff]
      %v533 = vld [vmem:[%s3 + $0x98] sm:$0xff]
      %v534 = vld [vmem:[%s3 + $0xa0] sm:$0xff]
      %v535 = vld [vmem:[%s3 + $0xa8] sm:$0xff]
      %v536 = vld [vmem:[%s3 + $0xb0] sm:$0xff]
      %v537 = vld [vmem:[%s3 + $0xb8] sm:$0xff]
      %v538 = vld [vmem:[%s3 + $0xc0] sm:$0xff]
      %v539 = vld [vmem:[%s3 + $0xc8] sm:$0xff]
      %v540 = vld [vmem:[%s3 + $0xd0] sm:$0xff]
      %v541 = vld [vmem:[%s3 + $0xd8] sm:$0xff]
      %v542 = vld [vmem:[%s3 + $0xe0] sm:$0xff]
      %v543 = vld [vmem:[%s3 + $0xe8] sm:$0xff]
      %v544 = vld [vmem:[%s3 + $0xf0] sm:$0xff]
      %v545 = vld [vmem:[%s3 + $0xf8] sm:$0xff]
      %v546 = vld [vmem:[%s3 + $0x100] sm:$0xff]
      %v547 = vld [vmem:[%s3 + $0x108] sm:$0xff]
      %v548 = vld [vmem:[%s3 + $0x110] sm:$0xff]
      %v549 = vld [vmem:[%s3 + $0x118] sm:$0xff]
      %v550 = vld [vmem:[%s3 + $0x120] sm:$0xff]
      %v551 = vld [vmem:[%s3 + $0x128] sm:$0xff]
      %v552 = vld [vmem:[%s3 + $0x130] sm:$0xff]
      %v553 = vld [vmem:[%s3 + $0x138] sm:$0xff]
      %v554 = vld [vmem:[%s3 + $0x140] sm:$0xff]
      %v555 = vld [vmem:[%s3 + $0x148] sm:$0xff]
      %v556 = vld [vmem:[%s3 + $0x150] sm:$0xff]
      %v557 = vld [vmem:[%s3 + $0x158] sm:$0xff]
      %v558 = vld [vmem:[%s3 + $0x160] sm:$0xff]
      %v559 = vld [vmem:[%s3 + $0x168] sm:$0xff]
      %v560 = vld [vmem:[%s3 + $0x170] sm:$0xff]
      %v561 = vld [vmem:[%s3 + $0x178] sm:$0xff]
      %v562 = vld [vmem:[%s3 + $0x180] sm:$0xff]
      %v563 = vld [vmem:[%s3 + $0x188] sm:$0xff]
      %v564 = vld [vmem:[%s3 + $0x190] sm:$0xff]
      %v565 = vld [vmem:[%s3 + $0x198] sm:$0xff]
      %v566 = vld [vmem:[%s3 + $0x1a0] sm:$0xff]
      %v567 = vld [vmem:[%s3 + $0x1a8] sm:$0xff]
      %v568 = vld [vmem:[%s3 + $0x1b0] sm:$0xff]
      %v569 = vld [vmem:[%s3 + $0x1b8] sm:$0xff]
      %v570 = vld [vmem:[%s3 + $0x1c0] sm:$0xff]
      %v571 = vld [vmem:[%s3 + $0x1c8] sm:$0xff]
      %v572 = vld [vmem:[%s3 + $0x1d0] sm:$0xff]
      %v573 = vld [vmem:[%s3 + $0x1d8] sm:$0xff]
      %v574 = vld [vmem:[%s3 + $0x1e0] sm:$0xff]
      %v575 = vld [vmem:[%s3 + $0x1e8] sm:$0xff]
      %v576 = vld [vmem:[%s3 + $0x1f0] sm:$0xff]
      %v577 = vld [vmem:[%s3 + $0x1f8] sm:$0xff]
      %v578 = vld [vmem:[%s3 + $0x200] sm:$0xff]
      %v579 = vld [vmem:[%s3 + $0x208] sm:$0xff]
      %v580 = vld [vmem:[%s3 + $0x210] sm:$0xff]
      %v581 = vld [vmem:[%s3 + $0x218] sm:$0xff]
      %v582 = vld [vmem:[%s3 + $0x220] sm:$0xff]
      %v583 = vld [vmem:[%s3 + $0x228] sm:$0xff]
      %v584 = vld [vmem:[%s3 + $0x230] sm:$0xff]
      %v585 = vld [vmem:[%s3 + $0x238] sm:$0xff]
      %v586 = vld [vmem:[%s3 + $0x240] sm:$0xff]
      %v587 = vld [vmem:[%s3 + $0x248] sm:$0xff]
      %v588 = vld [vmem:[%s3 + $0x250] sm:$0xff]
      %v589 = vld [vmem:[%s3 + $0x258] sm:$0xff]
      %v590 = vld [vmem:[%s3 + $0x260] sm:$0xff]
      %v591 = vld [vmem:[%s3 + $0x268] sm:$0xff]
      %v592 = vld [vmem:[%s3 + $0x270] sm:$0xff]
      %v593 = vld [vmem:[%s3 + $0x278] sm:$0xff]
      %v594 = vld [vmem:[%s3 + $0x280] sm:$0xff]
      %v595 = vld [vmem:[%s3 + $0x288] sm:$0xff]
      %v596 = vld [vmem:[%s3 + $0x290] sm:$0xff]
      %v597 = vld [vmem:[%s3 + $0x298] sm:$0xff]
      %v598 = vld [vmem:[%s3 + $0x2a0] sm:$0xff]
      %v599 = vld [vmem:[%s3 + $0x2a8] sm:$0xff]
      %v600 = vld [vmem:[%s3 + $0x2b0] sm:$0xff]
      %v601 = vld [vmem:[%s3 + $0x2b8] sm:$0xff]
      %v602 = vld [vmem:[%s3 + $0x2c0] sm:$0xff]
      %v603 = vld [vmem:[%s3 + $0x2c8] sm:$0xff]
      %v604 = vld [vmem:[%s3 + $0x2d0] sm:$0xff]
      %v605 = vld [vmem:[%s3 + $0x2d8] sm:$0xff]
      %v606 = vld [vmem:[%s3 + $0x2e0] sm:$0xff]
      %v607 = vld [vmem:[%s3 + $0x2e8] sm:$0xff]
      %v608 = vld [vmem:[%s3 + $0x2f0] sm:$0xff]
      %v609 = vld [vmem:[%s3 + $0x2f8] sm:$0xff]
      %v610 = vld [vmem:[%s3 + $0x300] sm:$0xff]
      %v611 = vld [vmem:[%s3 + $0x308] sm:$0xff]
      %v612 = vld [vmem:[%s3 + $0x310] sm:$0xff]
      %v613 = vld [vmem:[%s3 + $0x318] sm:$0xff]
      %v614 = vld [vmem:[%s3 + $0x320] sm:$0xff]
      %v615 = vld [vmem:[%s3 + $0x328] sm:$0xff]
      %v616 = vld [vmem:[%s3 + $0x330] sm:$0xff]
      %v617 = vld [vmem:[%s3 + $0x338] sm:$0xff]
      %v618 = vld [vmem:[%s3 + $0x340] sm:$0xff]
      %v619 = vld [vmem:[%s3 + $0x348] sm:$0xff]
      %v620 = vld [vmem:[%s3 + $0x350] sm:$0xff]
      %v621 = vld [vmem:[%s3 + $0x358] sm:$0xff]
      %v622 = vld [vmem:[%s3 + $0x360] sm:$0xff]
      %v623 = vld [vmem:[%s3 + $0x368] sm:$0xff]
      %v624 = vld [vmem:[%s3 + $0x370] sm:$0xff]
      %v625 = vld [vmem:[%s3 + $0x378] sm:$0xff]
      %v626 = vld [vmem:[%s4] sm:$0x3]
      %v628 = vlaneseq
      %v629 = vshrl.u32 %v628, 7
      %v630 = vsub.s32 0, %v629
      %v631 = vrot.slane %v626, %v630
      %v632 = vlaneseq
      %v633 = vshrl.u32 %v632, 7
      %v634 = vsub.s32 1, %v633
      %v635 = vrot.slane %v626, %v634
      %v750 = vunpack.c.l.b16 %v514
      %v751 = vunpack.c.h.b16 %v514
      %v752 = vunpack.c.l.b16 %v515
      %v753 = vunpack.c.h.b16 %v515
      %v754 = vunpack.c.l.b16 %v516
      %v755 = vunpack.c.h.b16 %v516
      %v756 = vunpack.c.l.b16 %v517
      %v757 = vunpack.c.h.b16 %v517
      %v758 = vunpack.c.l.b16 %v518
      %v759 = vunpack.c.h.b16 %v518
      %v760 = vunpack.c.l.b16 %v519
      %v761 = vunpack.c.h.b16 %v519
      %v762 = vunpack.c.l.b16 %v520
      %v763 = vunpack.c.h.b16 %v520
      %v764 = vunpack.c.l.b16 %v521
      %v765 = vunpack.c.h.b16 %v521
      %v766 = vunpack.c.l.b16 %v522
      %v767 = vunpack.c.h.b16 %v522
      %v768 = vunpack.c.l.b16 %v523
      %v769 = vunpack.c.h.b16 %v523
      %v770 = vunpack.c.l.b16 %v524
      %v771 = vunpack.c.h.b16 %v524
      %v772 = vunpack.c.l.b16 %v525
      %v773 = vunpack.c.h.b16 %v525
      %v774 = vunpack.c.l.b16 %v526
      %v775 = vunpack.c.h.b16 %v526
      %v776 = vunpack.c.l.b16 %v527
      %v777 = vunpack.c.h.b16 %v527
      %v778 = vunpack.c.l.b16 %v528
      %v779 = vunpack.c.h.b16 %v528
      %v780 = vunpack.c.l.b16 %v529
      %v781 = vunpack.c.h.b16 %v529
      %v782 = vunpack.c.l.b16 %v530
      %v783 = vunpack.c.h.b16 %v530
      %v784 = vunpack.c.l.b16 %v531
      %v785 = vunpack.c.h.b16 %v531
      %v786 = vunpack.c.l.b16 %v532
      %v787 = vunpack.c.h.b16 %v532
      %v788 = vunpack.c.l.b16 %v533
      %v789 = vunpack.c.h.b16 %v533
      %v790 = vunpack.c.l.b16 %v534
      %v791 = vunpack.c.h.b16 %v534
      %v792 = vunpack.c.l.b16 %v535
      %v793 = vunpack.c.h.b16 %v535
      %v794 = vunpack.c.l.b16 %v536
      %v795 = vunpack.c.h.b16 %v536
      %v796 = vunpack.c.l.b16 %v537
      %v797 = vunpack.c.h.b16 %v537
      %v798 = vunpack.c.l.b16 %v538
      %v799 = vunpack.c.h.b16 %v538
      %v800 = vunpack.c.l.b16 %v539
      %v801 = vunpack.c.h.b16 %v539
      %v802 = vunpack.c.l.b16 %v540
      %v803 = vunpack.c.h.b16 %v540
      %v804 = vunpack.c.l.b16 %v541
      %v805 = vunpack.c.h.b16 %v541
      %v806 = vunpack.c.l.b16 %v542
      %v807 = vunpack.c.h.b16 %v542
      %v808 = vunpack.c.l.b16 %v543
      %v809 = vunpack.c.h.b16 %v543
      %v810 = vunpack.c.l.b16 %v544
      %v811 = vunpack.c.h.b16 %v544
      %v812 = vunpack.c.l.b16 %v545
      %v813 = vunpack.c.h.b16 %v545
      %v814 = vunpack.c.l.b16 %v546
      %v815 = vunpack.c.h.b16 %v546
      %v816 = vunpack.c.l.b16 %v547
      %v817 = vunpack.c.h.b16 %v547
      %v818 = vunpack.c.l.b16 %v548
      %v819 = vunpack.c.h.b16 %v548
      %v820 = vunpack.c.l.b16 %v549
      %v821 = vunpack.c.h.b16 %v549
      %v822 = vunpack.c.l.b16 %v550
      %v823 = vunpack.c.h.b16 %v550
      %v824 = vunpack.c.l.b16 %v551
      %v825 = vunpack.c.h.b16 %v551
      %v826 = vunpack.c.l.b16 %v552
      %v827 = vunpack.c.h.b16 %v552
      %v828 = vunpack.c.l.b16 %v553
      %v829 = vunpack.c.h.b16 %v553
      %v830 = vunpack.c.l.b16 %v554
      %v831 = vunpack.c.h.b16 %v554
      %v832 = vunpack.c.l.b16 %v555
      %v833 = vunpack.c.h.b16 %v555
      %v834 = vunpack.c.l.b16 %v556
      %v835 = vunpack.c.h.b16 %v556
      %v836 = vunpack.c.l.b16 %v557
      %v837 = vunpack.c.h.b16 %v557
      %v838 = vunpack.c.l.b16 %v558
      %v839 = vunpack.c.h.b16 %v558
      %v840 = vunpack.c.l.b16 %v559
      %v841 = vunpack.c.h.b16 %v559
      %v842 = vunpack.c.l.b16 %v560
      %v843 = vunpack.c.h.b16 %v560
      %v844 = vunpack.c.l.b16 %v561
      %v845 = vunpack.c.h.b16 %v561
      %v846 = vunpack.c.l.b16 %v562
      %v847 = vunpack.c.h.b16 %v562
      %v848 = vunpack.c.l.b16 %v563
      %v849 = vunpack.c.h.b16 %v563
      %v850 = vunpack.c.l.b16 %v564
      %v851 = vunpack.c.h.b16 %v564
      %v852 = vunpack.c.l.b16 %v565
      %v853 = vunpack.c.h.b16 %v565
      %v854 = vunpack.c.l.b16 %v566
      %v855 = vunpack.c.h.b16 %v566
      %v856 = vunpack.c.l.b16 %v567
      %v857 = vunpack.c.h.b16 %v567
      %v858 = vunpack.c.l.b16 %v568
      %v859 = vunpack.c.h.b16 %v568
      %v860 = vunpack.c.l.b16 %v569
      %v861 = vunpack.c.h.b16 %v569
      %v862 = vunpack.c.l.b16 %v570
      %v863 = vunpack.c.h.b16 %v570
      %v864 = vunpack.c.l.b16 %v571
      %v865 = vunpack.c.h.b16 %v571
      %v866 = vunpack.c.l.b16 %v572
      %v867 = vunpack.c.h.b16 %v572
      %v868 = vunpack.c.l.b16 %v573
      %v869 = vunpack.c.h.b16 %v573
      %v870 = vunpack.c.l.b16 %v574
      %v871 = vunpack.c.h.b16 %v574
      %v872 = vunpack.c.l.b16 %v575
      %v873 = vunpack.c.h.b16 %v575
      %v874 = vunpack.c.l.b16 %v576
      %v875 = vunpack.c.h.b16 %v576
      %v876 = vunpack.c.l.b16 %v577
      %v877 = vunpack.c.h.b16 %v577
      %v878 = vunpack.c.l.b16 %v578
      %v879 = vunpack.c.h.b16 %v578
      %v880 = vunpack.c.l.b16 %v579
      %v881 = vunpack.c.h.b16 %v579
      %v882 = vunpack.c.l.b16 %v580
      %v883 = vunpack.c.h.b16 %v580
      %v884 = vunpack.c.l.b16 %v581
      %v885 = vunpack.c.h.b16 %v581
      %v886 = vunpack.c.l.b16 %v582
      %v887 = vunpack.c.h.b16 %v582
      %v888 = vunpack.c.l.b16 %v583
      %v889 = vunpack.c.h.b16 %v583
      %v890 = vunpack.c.l.b16 %v584
      %v891 = vunpack.c.h.b16 %v584
      %v892 = vunpack.c.l.b16 %v585
      %v893 = vunpack.c.h.b16 %v585
      %v894 = vunpack.c.l.b16 %v586
      %v895 = vunpack.c.h.b16 %v586
      %v896 = vunpack.c.l.b16 %v587
      %v897 = vunpack.c.h.b16 %v587
      %v898 = vunpack.c.l.b16 %v588
      %v899 = vunpack.c.h.b16 %v588
      %v900 = vunpack.c.l.b16 %v589
      %v901 = vunpack.c.h.b16 %v589
      %v902 = vunpack.c.l.b16 %v590
      %v903 = vunpack.c.h.b16 %v590
      %v904 = vunpack.c.l.b16 %v591
      %v905 = vunpack.c.h.b16 %v591
      %v906 = vunpack.c.l.b16 %v592
      %v907 = vunpack.c.h.b16 %v592
      %v908 = vunpack.c.l.b16 %v593
      %v909 = vunpack.c.h.b16 %v593
      %v910 = vunpack.c.l.b16 %v594
      %v911 = vunpack.c.h.b16 %v594
      %v912 = vunpack.c.l.b16 %v595
      %v913 = vunpack.c.h.b16 %v595
      %v914 = vunpack.c.l.b16 %v596
      %v915 = vunpack.c.h.b16 %v596
      %v916 = vunpack.c.l.b16 %v597
      %v917 = vunpack.c.h.b16 %v597
      %v918 = vunpack.c.l.b16 %v598
      %v919 = vunpack.c.h.b16 %v598
      %v920 = vunpack.c.l.b16 %v599
      %v921 = vunpack.c.h.b16 %v599
      %v922 = vunpack.c.l.b16 %v600
      %v923 = vunpack.c.h.b16 %v600
      %v924 = vunpack.c.l.b16 %v601
      %v925 = vunpack.c.h.b16 %v601
      %v926 = vunpack.c.l.b16 %v602
      %v927 = vunpack.c.h.b16 %v602
      %v928 = vunpack.c.l.b16 %v603
      %v929 = vunpack.c.h.b16 %v603
      %v930 = vunpack.c.l.b16 %v604
      %v931 = vunpack.c.h.b16 %v604
      %v932 = vunpack.c.l.b16 %v605
      %v933 = vunpack.c.h.b16 %v605
      %v934 = vunpack.c.l.b16 %v606
      %v935 = vunpack.c.h.b16 %v606
      %v936 = vunpack.c.l.b16 %v607
      %v937 = vunpack.c.h.b16 %v607
      %v938 = vunpack.c.l.b16 %v608
      %v939 = vunpack.c.h.b16 %v608
      %v940 = vunpack.c.l.b16 %v609
      %v941 = vunpack.c.h.b16 %v609
      %v942 = vunpack.c.l.b16 %v610
      %v943 = vunpack.c.h.b16 %v610
      %v944 = vunpack.c.l.b16 %v611
      %v945 = vunpack.c.h.b16 %v611
      %v946 = vunpack.c.l.b16 %v612
      %v947 = vunpack.c.h.b16 %v612
      %v948 = vunpack.c.l.b16 %v613
      %v949 = vunpack.c.h.b16 %v613
      %v950 = vunpack.c.l.b16 %v614
      %v951 = vunpack.c.h.b16 %v614
      %v952 = vunpack.c.l.b16 %v615
      %v953 = vunpack.c.h.b16 %v615
      %v954 = vunpack.c.l.b16 %v616
      %v955 = vunpack.c.h.b16 %v616
      %v956 = vunpack.c.l.b16 %v617
      %v957 = vunpack.c.h.b16 %v617
      %v958 = vunpack.c.l.b16 %v618
      %v959 = vunpack.c.h.b16 %v618
      %v960 = vunpack.c.l.b16 %v619
      %v961 = vunpack.c.h.b16 %v619
      %v962 = vunpack.c.l.b16 %v620
      %v963 = vunpack.c.h.b16 %v620
      %v964 = vunpack.c.l.b16 %v621
      %v965 = vunpack.c.h.b16 %v621
      %v966 = vunpack.c.l.b16 %v622
      %v967 = vunpack.c.h.b16 %v622
      %v968 = vunpack.c.l.b16 %v623
      %v969 = vunpack.c.h.b16 %v623
      %v970 = vunpack.c.l.b16 %v624
      %v971 = vunpack.c.h.b16 %v624
      %v972 = vunpack.c.l.b16 %v625
      %v973 = vunpack.c.h.b16 %v625
      %v974 = vpack.c.b16 %v752, %v750
      %v975 = vpack.c.b16 %v753, %v751
      %v976 = vpack.c.b16 %v756, %v754
      %v977 = vpack.c.b16 %v757, %v755
      %v978 = vpack.c.b16 %v760, %v758
      %v979 = vpack.c.b16 %v761, %v759
      %v980 = vpack.c.b16 %v764, %v762
      %v981 = vpack.c.b16 %v765, %v763
      %v982 = vpack.c.b16 %v768, %v766
      %v983 = vpack.c.b16 %v769, %v767
      %v984 = vpack.c.b16 %v772, %v770
      %v985 = vpack.c.b16 %v773, %v771
      %v986 = vpack.c.b16 %v776, %v774
      %v987 = vpack.c.b16 %v777, %v775
      %v988 = vpack.c.b16 %v780, %v778
      %v989 = vpack.c.b16 %v781, %v779
      %v990 = vpack.c.b16 %v784, %v782
      %v991 = vpack.c.b16 %v785, %v783
      %v992 = vpack.c.b16 %v788, %v786
      %v993 = vpack.c.b16 %v789, %v787
      %v994 = vpack.c.b16 %v792, %v790
      %v995 = vpack.c.b16 %v793, %v791
      %v996 = vpack.c.b16 %v796, %v794
      %v997 = vpack.c.b16 %v797, %v795
      %v998 = vpack.c.b16 %v800, %v798
      %v999 = vpack.c.b16 %v801, %v799
      %v1000 = vpack.c.b16 %v804, %v802
      %v1001 = vpack.c.b16 %v805, %v803
      %v1002 = vpack.c.b16 %v808, %v806
      %v1003 = vpack.c.b16 %v809, %v807
      %v1004 = vpack.c.b16 %v812, %v810
      %v1005 = vpack.c.b16 %v813, %v811
      %v1006 = vpack.c.b16 %v816, %v814
      %v1007 = vpack.c.b16 %v817, %v815
      %v1008 = vpack.c.b16 %v820, %v818
      %v1009 = vpack.c.b16 %v821, %v819
      %v1010 = vpack.c.b16 %v824, %v822
      %v1011 = vpack.c.b16 %v825, %v823
      %v1012 = vpack.c.b16 %v828, %v826
      %v1013 = vpack.c.b16 %v829, %v827
      %v1014 = vpack.c.b16 %v832, %v830
      %v1015 = vpack.c.b16 %v833, %v831
      %v1016 = vpack.c.b16 %v836, %v834
      %v1017 = vpack.c.b16 %v837, %v835
      %v1018 = vpack.c.b16 %v840, %v838
      %v1019 = vpack.c.b16 %v841, %v839
      %v1020 = vpack.c.b16 %v844, %v842
      %v1021 = vpack.c.b16 %v845, %v843
      %v1022 = vpack.c.b16 %v848, %v846
      %v1023 = vpack.c.b16 %v849, %v847
      %v1024 = vpack.c.b16 %v852, %v850
      %v1025 = vpack.c.b16 %v853, %v851
      %v1026 = vpack.c.b16 %v856, %v854
      %v1027 = vpack.c.b16 %v857, %v855
      %v1028 = vpack.c.b16 %v860, %v858
      %v1029 = vpack.c.b16 %v861, %v859
      %v1030 = vpack.c.b16 %v864, %v862
      %v1031 = vpack.c.b16 %v865, %v863
      %v1032 = vpack.c.b16 %v868, %v866
      %v1033 = vpack.c.b16 %v869, %v867
      %v1034 = vpack.c.b16 %v872, %v870
      %v1035 = vpack.c.b16 %v873, %v871
      %v1036 = vpack.c.b16 %v876, %v874
      %v1037 = vpack.c.b16 %v877, %v875
      %v1038 = vpack.c.b16 %v880, %v878
      %v1039 = vpack.c.b16 %v881, %v879
      %v1040 = vpack.c.b16 %v884, %v882
      %v1041 = vpack.c.b16 %v885, %v883
      %v1042 = vpack.c.b16 %v888, %v886
      %v1043 = vpack.c.b16 %v889, %v887
      %v1044 = vpack.c.b16 %v892, %v890
      %v1045 = vpack.c.b16 %v893, %v891
      %v1046 = vpack.c.b16 %v896, %v894
      %v1047 = vpack.c.b16 %v897, %v895
      %v1048 = vpack.c.b16 %v900, %v898
      %v1049 = vpack.c.b16 %v901, %v899
      %v1050 = vpack.c.b16 %v904, %v902
      %v1051 = vpack.c.b16 %v905, %v903
      %v1052 = vpack.c.b16 %v908, %v906
      %v1053 = vpack.c.b16 %v909, %v907
      %v1054 = vpack.c.b16 %v912, %v910
      %v1055 = vpack.c.b16 %v913, %v911
      %v1056 = vpack.c.b16 %v916, %v914
      %v1057 = vpack.c.b16 %v917, %v915
      %v1058 = vpack.c.b16 %v920, %v918
      %v1059 = vpack.c.b16 %v921, %v919
      %v1060 = vpack.c.b16 %v924, %v922
      %v1061 = vpack.c.b16 %v925, %v923
      %v1062 = vpack.c.b16 %v928, %v926
      %v1063 = vpack.c.b16 %v929, %v927
      %v1064 = vpack.c.b16 %v932, %v930
      %v1065 = vpack.c.b16 %v933, %v931
      %v1066 = vpack.c.b16 %v936, %v934
      %v1067 = vpack.c.b16 %v937, %v935
      %v1068 = vpack.c.b16 %v940, %v938
      %v1069 = vpack.c.b16 %v941, %v939
      %v1070 = vpack.c.b16 %v944, %v942
      %v1071 = vpack.c.b16 %v945, %v943
      %v1072 = vpack.c.b16 %v948, %v946
      %v1073 = vpack.c.b16 %v949, %v947
      %v1074 = vpack.c.b16 %v952, %v950
      %v1075 = vpack.c.b16 %v953, %v951
      %v1076 = vpack.c.b16 %v956, %v954
      %v1077 = vpack.c.b16 %v957, %v955
      %v1078 = vpack.c.b16 %v960, %v958
      %v1079 = vpack.c.b16 %v961, %v959
      %v1080 = vpack.c.b16 %v964, %v962
      %v1081 = vpack.c.b16 %v965, %v963
      %v1082 = vpack.c.b16 %v968, %v966
      %v1083 = vpack.c.b16 %v969, %v967
      %v1084 = vpack.c.b16 %v972, %v970
      %v1085 = vpack.c.b16 %v973, %v971
      %1198 = vmatprep.subr.bf16.mxu0 %v989
      %1199 = vmatpush1.bf16.msra.mxu0 %v988
      %1200 = vmatprep.subr.bf16.mxu0 %v987
      %1201 = vmatpush1.bf16.msra.mxu0 %v986
      %1202 = vmatprep.subr.bf16.mxu0 %v985
      %1203 = vmatpush1.bf16.msra.mxu0 %v984
      %1204 = vmatprep.subr.bf16.mxu0 %v983
      %1205 = vmatpush1.bf16.msra.mxu0 %v982
      %1206 = vmatprep.subr.bf16.mxu0 %v981
      %1207 = vmatpush1.bf16.msra.mxu0 %v980
      %1208 = vmatprep.subr.bf16.mxu0 %v979
      %1209 = vmatpush1.bf16.msra.mxu0 %v978
      %1210 = vmatprep.subr.bf16.mxu0 %v977
      %1211 = vmatpush1.bf16.msra.mxu0 %v976
      %1212 = vmatprep.subr.bf16.mxu0 %v975
      %1213 = vmatpush1.bf16.msra.mxu0 %v974
      %1214 = vmatprep.subr.bf16.mxu0 %v1005
      %1215 = vmatpush2.bf16.msra.mxu0 %v1004
      %1216 = vmatprep.subr.bf16.mxu0 %v1003
      %1217 = vmatpush2.bf16.msra.mxu0 %v1002
      %1218 = vmatprep.subr.bf16.mxu0 %v1001
      %1219 = vmatpush2.bf16.msra.mxu0 %v1000
      %1220 = vmatprep.subr.bf16.mxu0 %v999
      %1221 = vmatpush2.bf16.msra.mxu0 %v998
      %1222 = vmatprep.subr.bf16.mxu0 %v997
      %1223 = vmatpush2.bf16.msra.mxu0 %v996
      %1224 = vmatprep.subr.bf16.mxu0 %v995
      %1225 = vmatpush2.bf16.msra.mxu0 %v994
      %1226 = vmatprep.subr.bf16.mxu0 %v993
      %1227 = vmatpush2.bf16.msra.mxu0 %v992
      %1228 = vmatprep.subr.bf16.mxu0 %v991
      %1229 = vmatpush2.bf16.msra.mxu0 %v990
      %1230 = vmatprep.mubr.bf16.mxu0 %v477
      %1231 = vmatmul.mubr.bf16.gmra.mxu0 %v362
      %v1232 = vpop.f32.mrf.mxu0
      %v1233 = vadd.f32 %v631, %v1232
      %v1234 = vpop.f32.mrf.mxu0
      %v1235 = vadd.f32 %v635, %v1234
      %v1236 = vpop.f32.mrf.mxu0
      %v1237 = vadd.f32 %v631, %v1236
      %v1238 = vpop.f32.mrf.mxu0
      %v1239 = vadd.f32 %v635, %v1238
      %1240 = vdwg.mxu0
      %1241 = vmatprep.subr.bf16.mxu0 %v1021
      %1242 = vmatpush1.bf16.msra.mxu0 %v1020
      %1243 = vmatprep.subr.bf16.mxu0 %v1019
      %1244 = vmatpush1.bf16.msra.mxu0 %v1018
      %1245 = vmatprep.subr.bf16.mxu0 %v1017
      %1246 = vmatpush1.bf16.msra.mxu0 %v1016
      %1247 = vmatprep.subr.bf16.mxu0 %v1015
      %1248 = vmatpush1.bf16.msra.mxu0 %v1014
      %1249 = vmatprep.subr.bf16.mxu0 %v1013
      %1250 = vmatpush1.bf16.msra.mxu0 %v1012
      %1251 = vmatprep.subr.bf16.mxu0 %v1011
      %1252 = vmatpush1.bf16.msra.mxu0 %v1010
      %1253 = vmatprep.subr.bf16.mxu0 %v1009
      %1254 = vmatpush1.bf16.msra.mxu0 %v1008
      %1255 = vmatprep.subr.bf16.mxu0 %v1007
      %1256 = vmatpush1.bf16.msra.mxu0 %v1006
      %1257 = vmatprep.subr.bf16.mxu0 %v1037
      %1258 = vmatpush2.bf16.msra.mxu0 %v1036
      %1259 = vmatprep.subr.bf16.mxu0 %v1035
      %1260 = vmatpush2.bf16.msra.mxu0 %v1034
      %1261 = vmatprep.subr.bf16.mxu0 %v1033
      %1262 = vmatpush2.bf16.msra.mxu0 %v1032
      %1263 = vmatprep.subr.bf16.mxu0 %v1031
      %1264 = vmatpush2.bf16.msra.mxu0 %v1030
      %1265 = vmatprep.subr.bf16.mxu0 %v1029
      %1266 = vmatpush2.bf16.msra.mxu0 %v1028
      %1267 = vmatprep.subr.bf16.mxu0 %v1027
      %1268 = vmatpush2.bf16.msra.mxu0 %v1026
      %1269 = vmatprep.subr.bf16.mxu0 %v1025
      %1270 = vmatpush2.bf16.msra.mxu0 %v1024
      %1271 = vmatprep.subr.bf16.mxu0 %v1023
      %1272 = vmatpush2.bf16.msra.mxu0 %v1022
      %1273 = vmatprep.mubr.bf16.mxu0 %v493
      %1274 = vmatmul.mubr.bf16.gmra.mxu0 %v482
      %v1275 = vpop.f32.mrf.mxu0
      %v1276 = vadd.f32 %v1233, %v1275
      %v1277 = vpop.f32.mrf.mxu0
      %v1278 = vadd.f32 %v1235, %v1277
      %v1279 = vpop.f32.mrf.mxu0
      %v1280 = vadd.f32 %v1237, %v1279
      %v1281 = vpop.f32.mrf.mxu0
      %v1282 = vadd.f32 %v1239, %v1281
      %1283 = vdwg.mxu0
      %1284 = vmatprep.subr.bf16.mxu0 %v1053
      %1285 = vmatpush1.bf16.msra.mxu0 %v1052
      %1286 = vmatprep.subr.bf16.mxu0 %v1051
      %1287 = vmatpush1.bf16.msra.mxu0 %v1050
      %1288 = vmatprep.subr.bf16.mxu0 %v1049
      %1289 = vmatpush1.bf16.msra.mxu0 %v1048
      %1290 = vmatprep.subr.bf16.mxu0 %v1047
      %1291 = vmatpush1.bf16.msra.mxu0 %v1046
      %1292 = vmatprep.subr.bf16.mxu0 %v1045
      %1293 = vmatpush1.bf16.msra.mxu0 %v1044
      %1294 = vmatprep.subr.bf16.mxu0 %v1043
      %1295 = vmatpush1.bf16.msra.mxu0 %v1042
      %1296 = vmatprep.subr.bf16.mxu0 %v1041
      %1297 = vmatpush1.bf16.msra.mxu0 %v1040
      %1298 = vmatprep.subr.bf16.mxu0 %v1039
      %1299 = vmatpush1.bf16.msra.mxu0 %v1038
      %1300 = vmatprep.subr.bf16.mxu0 %v1069
      %1301 = vmatpush2.bf16.msra.mxu0 %v1068
      %1302 = vmatprep.subr.bf16.mxu0 %v1067
      %1303 = vmatpush2.bf16.msra.mxu0 %v1066
      %1304 = vmatprep.subr.bf16.mxu0 %v1065
      %1305 = vmatpush2.bf16.msra.mxu0 %v1064
      %1306 = vmatprep.subr.bf16.mxu0 %v1063
      %1307 = vmatpush2.bf16.msra.mxu0 %v1062
      %1308 = vmatprep.subr.bf16.mxu0 %v1061
      %1309 = vmatpush2.bf16.msra.mxu0 %v1060
      %1310 = vmatprep.subr.bf16.mxu0 %v1059
      %1311 = vmatpush2.bf16.msra.mxu0 %v1058
      %1312 = vmatprep.subr.bf16.mxu0 %v1057
      %1313 = vmatpush2.bf16.msra.mxu0 %v1056
      %1314 = vmatprep.subr.bf16.mxu0 %v1055
      %1315 = vmatpush2.bf16.msra.mxu0 %v1054
      %1316 = vmatprep.mubr.bf16.mxu0 %v507
      %1317 = vmatmul.mubr.bf16.gmra.mxu0 %v498
      %v1318 = vpop.f32.mrf.mxu0
      %v1319 = vadd.f32 %v1276, %v1318
      %v1320 = vpop.f32.mrf.mxu0
      %v1321 = vadd.f32 %v1278, %v1320
      %v1322 = vpop.f32.mrf.mxu0
      %v1323 = vadd.f32 %v1280, %v1322
      %v1324 = vpop.f32.mrf.mxu0
      %v1325 = vadd.f32 %v1282, %v1324
      %1326 = vdwg.mxu0
      %1327 = vmatprep.subr.bf16.mxu0 %v1085
      %1328 = vmatpush1.bf16.msra.mxu0 %v1084
      %1329 = vmatprep.subr.bf16.mxu0 %v1083
      %1330 = vmatpush1.bf16.msra.mxu0 %v1082
      %1331 = vmatprep.subr.bf16.mxu0 %v1081
      %1332 = vmatpush1.bf16.msra.mxu0 %v1080
      %1333 = vmatprep.subr.bf16.mxu0 %v1079
      %1334 = vmatpush1.bf16.msra.mxu0 %v1078
      %1335 = vmatprep.subr.bf16.mxu0 %v1077
      %1336 = vmatpush1.bf16.msra.mxu0 %v1076
      %1337 = vmatprep.subr.bf16.mxu0 %v1075
      %1338 = vmatpush1.bf16.msra.mxu0 %v1074
      %1339 = vmatprep.subr.bf16.mxu0 %v1073
      %1340 = vmatpush1.bf16.msra.mxu0 %v1072
      %1341 = vmatprep.subr.bf16.mxu0 %v1071
      %1342 = vmatpush1.bf16.msra.mxu0 %v1070
      %1343 = vmatprep.subr.bf16.mxu0 0
      %1344 = vmatpush2.bf16.msra.mxu0 0
      %1345 = vmatprep.subr.bf16.mxu0 0
      %1346 = vmatpush2.bf16.msra.mxu0 0
      %1347 = vmatprep.subr.bf16.mxu0 0
      %1348 = vmatpush2.bf16.msra.mxu0 0
      %1349 = vmatprep.subr.bf16.mxu0 0
      %1350 = vmatpush2.bf16.msra.mxu0 0
      %1351 = vmatprep.subr.bf16.mxu0 0
      %1352 = vmatpush2.bf16.msra.mxu0 0
      %1353 = vmatprep.subr.bf16.mxu0 0
      %1354 = vmatpush2.bf16.msra.mxu0 0
      %1355 = vmatprep.subr.bf16.mxu0 0
      %1356 = vmatpush2.bf16.msra.mxu0 0
      %1357 = vmatprep.subr.bf16.mxu0 0
      %1358 = vmatpush2.bf16.msra.mxu0 0
      %1359 = vmatprep.mubr.bf16.mxu0 0
      %1360 = vmatmul.mubr.bf16.gmra.mxu0 %v512
      %v1361 = vpop.f32.mrf.mxu0
      %v1362 = vadd.f32 %v1319, %v1361
      %v1363 = vpop.f32.mrf.mxu0
      %v1364 = vadd.f32 %v1321, %v1363
      %v1365 = vpop.f32.mrf.mxu0
      %v1366 = vadd.f32 %v1323, %v1365
      %v1367 = vpop.f32.mrf.mxu0
      %v1368 = vadd.f32 %v1325, %v1367
      %1369 = vdwg.mxu0
      %v1370 = vmax.f32 %v1362, 0.0
      %v1371 = vmax.f32 %v1364, 0.0
      %v1372 = vmax.f32 %v1366, 0.0
      %v1373 = vmax.f32 %v1368, 0.0
      %v1374 = vpack.c.bf16 %v463, %v462
      %v1375 = vpack.c.bf16 %v464, %v464
      %v1377 = vshrl.u32 %v1374, 16
      %v1379 = vshll.u32 %v1374, 16
      %v1381 = vrot.slane %v1379, 1
      %v1382 = vor.u32 %v1377, %v1381
      %v1384 = vshll.u32 %v1375, 16
      %v1386 = vrot.slane %v1384, 1
      %v1387 = vsel %vm465, %v1382, %v1386
      %v1391 = vrot.slane %v1374, 1
      %v1392 = vrot.slane %v1375, 1
      %v1393 = vsel %vm479, %v1391, %v1392
      %v1395 = vrot.slane %v1377, 1
      %v1396 = vrot.slane %v1379, 2
      %v1397 = vor.u32 %v1395, %v1396
      %v1398 = vshrl.u32 %v1375, 16
      %v1400 = vrot.slane %v1398, 1
      %v1401 = vrot.slane %v1384, 2
      %v1402 = vor.u32 %v1400, %v1401
      %v1403 = vsel %vm484, %v1397, %v1402
      %v1405 = vrot.slane %v1374, 2
      %v1406 = vrot.slane %v1375, 2
      %v1407 = vsel %vm495, %v1405, %v1406
      %v1409 = vrot.slane %v1377, 2
      %v1410 = vrot.slane %v1379, 3
      %v1411 = vor.u32 %v1409, %v1410
      %v1412 = vrot.slane %v1398, 2
      %v1413 = vrot.slane %v1384, 3
      %v1414 = vor.u32 %v1412, %v1413
      %v1415 = vsel %vm500, %v1411, %v1414
      %v1417 = vrot.slane %v1374, 3
      %v1418 = vrot.slane %v1375, 3
      %v1419 = vsel %vm509, %v1417, %v1418
      %v1421 = vld [vmem:[%s5] sm:$0xf]
      %v1422 = vld [vmem:[%s5 + $0x4] sm:$0xf]
      %v1423 = vld [vmem:[%s5 + $0x8] sm:$0xf]
      %v1424 = vld [vmem:[%s5 + $0xc] sm:$0xf]
      %v1425 = vld [vmem:[%s5 + $0x10] sm:$0xf]
      %v1426 = vld [vmem:[%s5 + $0x14] sm:$0xf]
      %v1427 = vld [vmem:[%s5 + $0x18] sm:$0xf]
      %v1428 = vld [vmem:[%s5 + $0x1c] sm:$0xf]
      %v1429 = vld [vmem:[%s5 + $0x20] sm:$0xf]
      %v1430 = vld [vmem:[%s5 + $0x24] sm:$0xf]
      %v1431 = vld [vmem:[%s5 + $0x28] sm:$0xf]
      %v1432 = vld [vmem:[%s5 + $0x2c] sm:$0xf]
      %v1433 = vld [vmem:[%s5 + $0x30] sm:$0xf]
      %v1434 = vld [vmem:[%s5 + $0x34] sm:$0xf]
      %v1435 = vld [vmem:[%s5 + $0x38] sm:$0xf]
      %v1436 = vld [vmem:[%s5 + $0x3c] sm:$0xf]
      %v1437 = vld [vmem:[%s5 + $0x40] sm:$0xf]
      %v1438 = vld [vmem:[%s5 + $0x44] sm:$0xf]
      %v1439 = vld [vmem:[%s5 + $0x48] sm:$0xf]
      %v1440 = vld [vmem:[%s5 + $0x4c] sm:$0xf]
      %v1441 = vld [vmem:[%s5 + $0x50] sm:$0xf]
      %v1442 = vld [vmem:[%s5 + $0x54] sm:$0xf]
      %v1443 = vld [vmem:[%s5 + $0x58] sm:$0xf]
      %v1444 = vld [vmem:[%s5 + $0x5c] sm:$0xf]
      %v1445 = vld [vmem:[%s5 + $0x60] sm:$0xf]
      %v1446 = vld [vmem:[%s5 + $0x64] sm:$0xf]
      %v1447 = vld [vmem:[%s5 + $0x68] sm:$0xf]
      %v1448 = vld [vmem:[%s5 + $0x6c] sm:$0xf]
      %v1449 = vld [vmem:[%s5 + $0x70] sm:$0xf]
      %v1450 = vld [vmem:[%s5 + $0x74] sm:$0xf]
      %v1451 = vld [vmem:[%s5 + $0x78] sm:$0xf]
      %v1452 = vld [vmem:[%s5 + $0x7c] sm:$0xf]
      %v1453 = vld [vmem:[%s5 + $0x80] sm:$0xf]
      %v1454 = vld [vmem:[%s5 + $0x84] sm:$0xf]
      %v1455 = vld [vmem:[%s5 + $0x88] sm:$0xf]
      %v1456 = vld [vmem:[%s5 + $0x8c] sm:$0xf]
      %v1457 = vld [vmem:[%s5 + $0x90] sm:$0xf]
      %v1458 = vld [vmem:[%s5 + $0x94] sm:$0xf]
      %v1459 = vld [vmem:[%s5 + $0x98] sm:$0xf]
      %v1460 = vld [vmem:[%s5 + $0x9c] sm:$0xf]
      %v1461 = vld [vmem:[%s5 + $0xa0] sm:$0xf]
      %v1462 = vld [vmem:[%s5 + $0xa4] sm:$0xf]
      %v1463 = vld [vmem:[%s5 + $0xa8] sm:$0xf]
      %v1464 = vld [vmem:[%s5 + $0xac] sm:$0xf]
      %v1465 = vld [vmem:[%s5 + $0xb0] sm:$0xf]
      %v1466 = vld [vmem:[%s5 + $0xb4] sm:$0xf]
      %v1467 = vld [vmem:[%s5 + $0xb8] sm:$0xf]
      %v1468 = vld [vmem:[%s5 + $0xbc] sm:$0xf]
      %v1469 = vld [vmem:[%s5 + $0xc0] sm:$0xf]
      %v1470 = vld [vmem:[%s5 + $0xc4] sm:$0xf]
      %v1471 = vld [vmem:[%s5 + $0xc8] sm:$0xf]
      %v1472 = vld [vmem:[%s5 + $0xcc] sm:$0xf]
      %v1473 = vld [vmem:[%s5 + $0xd0] sm:$0xf]
      %v1474 = vld [vmem:[%s5 + $0xd4] sm:$0xf]
      %v1475 = vld [vmem:[%s5 + $0xd8] sm:$0xf]
      %v1476 = vld [vmem:[%s5 + $0xdc] sm:$0xf]
      %v1477 = vld [vmem:[%s5 + $0xe0] sm:$0xf]
      %v1478 = vld [vmem:[%s5 + $0xe4] sm:$0xf]
      %v1479 = vld [vmem:[%s5 + $0xe8] sm:$0xf]
      %v1480 = vld [vmem:[%s5 + $0xec] sm:$0xf]
      %v1481 = vld [vmem:[%s5 + $0xf0] sm:$0xf]
      %v1482 = vld [vmem:[%s5 + $0xf4] sm:$0xf]
      %v1483 = vld [vmem:[%s5 + $0xf8] sm:$0xf]
      %v1484 = vld [vmem:[%s5 + $0xfc] sm:$0xf]
      %v1485 = vld [vmem:[%s5 + $0x100] sm:$0xf]
      %v1486 = vld [vmem:[%s5 + $0x104] sm:$0xf]
      %v1487 = vld [vmem:[%s5 + $0x108] sm:$0xf]
      %v1488 = vld [vmem:[%s5 + $0x10c] sm:$0xf]
      %v1489 = vld [vmem:[%s5 + $0x110] sm:$0xf]
      %v1490 = vld [vmem:[%s5 + $0x114] sm:$0xf]
      %v1491 = vld [vmem:[%s5 + $0x118] sm:$0xf]
      %v1492 = vld [vmem:[%s5 + $0x11c] sm:$0xf]
      %v1493 = vld [vmem:[%s5 + $0x120] sm:$0xf]
      %v1494 = vld [vmem:[%s5 + $0x124] sm:$0xf]
      %v1495 = vld [vmem:[%s5 + $0x128] sm:$0xf]
      %v1496 = vld [vmem:[%s5 + $0x12c] sm:$0xf]
      %v1497 = vld [vmem:[%s5 + $0x130] sm:$0xf]
      %v1498 = vld [vmem:[%s5 + $0x134] sm:$0xf]
      %v1499 = vld [vmem:[%s5 + $0x138] sm:$0xf]
      %v1500 = vld [vmem:[%s5 + $0x13c] sm:$0xf]
      %v1501 = vld [vmem:[%s5 + $0x140] sm:$0xf]
      %v1502 = vld [vmem:[%s5 + $0x144] sm:$0xf]
      %v1503 = vld [vmem:[%s5 + $0x148] sm:$0xf]
      %v1504 = vld [vmem:[%s5 + $0x14c] sm:$0xf]
      %v1505 = vld [vmem:[%s5 + $0x150] sm:$0xf]
      %v1506 = vld [vmem:[%s5 + $0x154] sm:$0xf]
      %v1507 = vld [vmem:[%s5 + $0x158] sm:$0xf]
      %v1508 = vld [vmem:[%s5 + $0x15c] sm:$0xf]
      %v1509 = vld [vmem:[%s5 + $0x160] sm:$0xf]
      %v1510 = vld [vmem:[%s5 + $0x164] sm:$0xf]
      %v1511 = vld [vmem:[%s5 + $0x168] sm:$0xf]
      %v1512 = vld [vmem:[%s5 + $0x16c] sm:$0xf]
      %v1513 = vld [vmem:[%s5 + $0x170] sm:$0xf]
      %v1514 = vld [vmem:[%s5 + $0x174] sm:$0xf]
      %v1515 = vld [vmem:[%s5 + $0x178] sm:$0xf]
      %v1516 = vld [vmem:[%s5 + $0x17c] sm:$0xf]
      %v1517 = vld [vmem:[%s5 + $0x180] sm:$0xf]
      %v1518 = vld [vmem:[%s5 + $0x184] sm:$0xf]
      %v1519 = vld [vmem:[%s5 + $0x188] sm:$0xf]
      %v1520 = vld [vmem:[%s5 + $0x18c] sm:$0xf]
      %v1521 = vld [vmem:[%s5 + $0x190] sm:$0xf]
      %v1522 = vld [vmem:[%s5 + $0x194] sm:$0xf]
      %v1523 = vld [vmem:[%s5 + $0x198] sm:$0xf]
      %v1524 = vld [vmem:[%s5 + $0x19c] sm:$0xf]
      %v1525 = vld [vmem:[%s5 + $0x1a0] sm:$0xf]
      %v1526 = vld [vmem:[%s5 + $0x1a4] sm:$0xf]
      %v1527 = vld [vmem:[%s5 + $0x1a8] sm:$0xf]
      %v1528 = vld [vmem:[%s5 + $0x1ac] sm:$0xf]
      %v1529 = vld [vmem:[%s5 + $0x1b0] sm:$0xf]
      %v1530 = vld [vmem:[%s5 + $0x1b4] sm:$0xf]
      %v1531 = vld [vmem:[%s5 + $0x1b8] sm:$0xf]
      %v1532 = vld [vmem:[%s5 + $0x1bc] sm:$0xf]
      %v1533 = vld [vmem:[%s6] sm:$0x1]
      %v1535 = vlaneseq
      %v1536 = vshrl.u32 %v1535, 7
      %v1537 = vsub.s32 0, %v1536
      %v1538 = vrot.slane %v1533, %v1537
      %v1652 = vunpack.c.l.b16 %v1421
      %v1653 = vunpack.c.l.b16 %v1422
      %v1654 = vunpack.c.l.b16 %v1423
      %v1655 = vunpack.c.l.b16 %v1424
      %v1656 = vunpack.c.l.b16 %v1425
      %v1657 = vunpack.c.l.b16 %v1426
      %v1658 = vunpack.c.l.b16 %v1427
      %v1659 = vunpack.c.l.b16 %v1428
      %v1660 = vunpack.c.l.b16 %v1429
      %v1661 = vunpack.c.l.b16 %v1430
      %v1662 = vunpack.c.l.b16 %v1431
      %v1663 = vunpack.c.l.b16 %v1432
      %v1664 = vunpack.c.l.b16 %v1433
      %v1665 = vunpack.c.l.b16 %v1434
      %v1666 = vunpack.c.l.b16 %v1435
      %v1667 = vunpack.c.l.b16 %v1436
      %v1668 = vunpack.c.l.b16 %v1437
      %v1669 = vunpack.c.l.b16 %v1438
      %v1670 = vunpack.c.l.b16 %v1439
      %v1671 = vunpack.c.l.b16 %v1440
      %v1672 = vunpack.c.l.b16 %v1441
      %v1673 = vunpack.c.l.b16 %v1442
      %v1674 = vunpack.c.l.b16 %v1443
      %v1675 = vunpack.c.l.b16 %v1444
      %v1676 = vunpack.c.l.b16 %v1445
      %v1677 = vunpack.c.l.b16 %v1446
      %v1678 = vunpack.c.l.b16 %v1447
      %v1679 = vunpack.c.l.b16 %v1448
      %v1680 = vunpack.c.l.b16 %v1449
      %v1681 = vunpack.c.l.b16 %v1450
      %v1682 = vunpack.c.l.b16 %v1451
      %v1683 = vunpack.c.l.b16 %v1452
      %v1684 = vunpack.c.l.b16 %v1453
      %v1685 = vunpack.c.l.b16 %v1454
      %v1686 = vunpack.c.l.b16 %v1455
      %v1687 = vunpack.c.l.b16 %v1456
      %v1688 = vunpack.c.l.b16 %v1457
      %v1689 = vunpack.c.l.b16 %v1458
      %v1690 = vunpack.c.l.b16 %v1459
      %v1691 = vunpack.c.l.b16 %v1460
      %v1692 = vunpack.c.l.b16 %v1461
      %v1693 = vunpack.c.l.b16 %v1462
      %v1694 = vunpack.c.l.b16 %v1463
      %v1695 = vunpack.c.l.b16 %v1464
      %v1696 = vunpack.c.l.b16 %v1465
      %v1697 = vunpack.c.l.b16 %v1466
      %v1698 = vunpack.c.l.b16 %v1467
      %v1699 = vunpack.c.l.b16 %v1468
      %v1700 = vunpack.c.l.b16 %v1469
      %v1701 = vunpack.c.l.b16 %v1470
      %v1702 = vunpack.c.l.b16 %v1471
      %v1703 = vunpack.c.l.b16 %v1472
      %v1704 = vunpack.c.l.b16 %v1473
      %v1705 = vunpack.c.l.b16 %v1474
      %v1706 = vunpack.c.l.b16 %v1475
      %v1707 = vunpack.c.l.b16 %v1476
      %v1708 = vunpack.c.l.b16 %v1477
      %v1709 = vunpack.c.l.b16 %v1478
      %v1710 = vunpack.c.l.b16 %v1479
      %v1711 = vunpack.c.l.b16 %v1480
      %v1712 = vunpack.c.l.b16 %v1481
      %v1713 = vunpack.c.l.b16 %v1482
      %v1714 = vunpack.c.l.b16 %v1483
      %v1715 = vunpack.c.l.b16 %v1484
      %v1716 = vunpack.c.l.b16 %v1485
      %v1717 = vunpack.c.l.b16 %v1486
      %v1718 = vunpack.c.l.b16 %v1487
      %v1719 = vunpack.c.l.b16 %v1488
      %v1720 = vunpack.c.l.b16 %v1489
      %v1721 = vunpack.c.l.b16 %v1490
      %v1722 = vunpack.c.l.b16 %v1491
      %v1723 = vunpack.c.l.b16 %v1492
      %v1724 = vunpack.c.l.b16 %v1493
      %v1725 = vunpack.c.l.b16 %v1494
      %v1726 = vunpack.c.l.b16 %v1495
      %v1727 = vunpack.c.l.b16 %v1496
      %v1728 = vunpack.c.l.b16 %v1497
      %v1729 = vunpack.c.l.b16 %v1498
      %v1730 = vunpack.c.l.b16 %v1499
      %v1731 = vunpack.c.l.b16 %v1500
      %v1732 = vunpack.c.l.b16 %v1501
      %v1733 = vunpack.c.l.b16 %v1502
      %v1734 = vunpack.c.l.b16 %v1503
      %v1735 = vunpack.c.l.b16 %v1504
      %v1736 = vunpack.c.l.b16 %v1505
      %v1737 = vunpack.c.l.b16 %v1506
      %v1738 = vunpack.c.l.b16 %v1507
      %v1739 = vunpack.c.l.b16 %v1508
      %v1740 = vunpack.c.l.b16 %v1509
      %v1741 = vunpack.c.l.b16 %v1510
      %v1742 = vunpack.c.l.b16 %v1511
      %v1743 = vunpack.c.l.b16 %v1512
      %v1744 = vunpack.c.l.b16 %v1513
      %v1745 = vunpack.c.l.b16 %v1514
      %v1746 = vunpack.c.l.b16 %v1515
      %v1747 = vunpack.c.l.b16 %v1516
      %v1748 = vunpack.c.l.b16 %v1517
      %v1749 = vunpack.c.l.b16 %v1518
      %v1750 = vunpack.c.l.b16 %v1519
      %v1751 = vunpack.c.l.b16 %v1520
      %v1752 = vunpack.c.l.b16 %v1521
      %v1753 = vunpack.c.l.b16 %v1522
      %v1754 = vunpack.c.l.b16 %v1523
      %v1755 = vunpack.c.l.b16 %v1524
      %v1756 = vunpack.c.l.b16 %v1525
      %v1757 = vunpack.c.l.b16 %v1526
      %v1758 = vunpack.c.l.b16 %v1527
      %v1759 = vunpack.c.l.b16 %v1528
      %v1760 = vunpack.c.l.b16 %v1529
      %v1761 = vunpack.c.l.b16 %v1530
      %v1762 = vunpack.c.l.b16 %v1531
      %v1763 = vunpack.c.l.b16 %v1532
      %v1764 = vpack.c.b16 %v1653, %v1652
      %v1765 = vpack.c.b16 %v1655, %v1654
      %v1766 = vpack.c.b16 %v1657, %v1656
      %v1767 = vpack.c.b16 %v1659, %v1658
      %v1768 = vpack.c.b16 %v1661, %v1660
      %v1769 = vpack.c.b16 %v1663, %v1662
      %v1770 = vpack.c.b16 %v1665, %v1664
      %v1771 = vpack.c.b16 %v1667, %v1666
      %v1772 = vpack.c.b16 %v1669, %v1668
      %v1773 = vpack.c.b16 %v1671, %v1670
      %v1774 = vpack.c.b16 %v1673, %v1672
      %v1775 = vpack.c.b16 %v1675, %v1674
      %v1776 = vpack.c.b16 %v1677, %v1676
      %v1777 = vpack.c.b16 %v1679, %v1678
      %v1778 = vpack.c.b16 %v1681, %v1680
      %v1779 = vpack.c.b16 %v1683, %v1682
      %v1780 = vpack.c.b16 %v1685, %v1684
      %v1781 = vpack.c.b16 %v1687, %v1686
      %v1782 = vpack.c.b16 %v1689, %v1688
      %v1783 = vpack.c.b16 %v1691, %v1690
      %v1784 = vpack.c.b16 %v1693, %v1692
      %v1785 = vpack.c.b16 %v1695, %v1694
      %v1786 = vpack.c.b16 %v1697, %v1696
      %v1787 = vpack.c.b16 %v1699, %v1698
      %v1788 = vpack.c.b16 %v1701, %v1700
      %v1789 = vpack.c.b16 %v1703, %v1702
      %v1790 = vpack.c.b16 %v1705, %v1704
      %v1791 = vpack.c.b16 %v1707, %v1706
      %v1792 = vpack.c.b16 %v1709, %v1708
      %v1793 = vpack.c.b16 %v1711, %v1710
      %v1794 = vpack.c.b16 %v1713, %v1712
      %v1795 = vpack.c.b16 %v1715, %v1714
      %v1796 = vpack.c.b16 %v1717, %v1716
      %v1797 = vpack.c.b16 %v1719, %v1718
      %v1798 = vpack.c.b16 %v1721, %v1720
      %v1799 = vpack.c.b16 %v1723, %v1722
      %v1800 = vpack.c.b16 %v1725, %v1724
      %v1801 = vpack.c.b16 %v1727, %v1726
      %v1802 = vpack.c.b16 %v1729, %v1728
      %v1803 = vpack.c.b16 %v1731, %v1730
      %v1804 = vpack.c.b16 %v1733, %v1732
      %v1805 = vpack.c.b16 %v1735, %v1734
      %v1806 = vpack.c.b16 %v1737, %v1736
      %v1807 = vpack.c.b16 %v1739, %v1738
      %v1808 = vpack.c.b16 %v1741, %v1740
      %v1809 = vpack.c.b16 %v1743, %v1742
      %v1810 = vpack.c.b16 %v1745, %v1744
      %v1811 = vpack.c.b16 %v1747, %v1746
      %v1812 = vpack.c.b16 %v1749, %v1748
      %v1813 = vpack.c.b16 %v1751, %v1750
      %v1814 = vpack.c.b16 %v1753, %v1752
      %v1815 = vpack.c.b16 %v1755, %v1754
      %v1816 = vpack.c.b16 %v1757, %v1756
      %v1817 = vpack.c.b16 %v1759, %v1758
      %v1818 = vpack.c.b16 %v1761, %v1760
      %v1819 = vpack.c.b16 %v1763, %v1762
      %1876 = vmatprep.subr.bf16.mxu0 0
      %1877 = vmatpush1.bf16.msra.mxu0 %v1771
      %1878 = vmatprep.subr.bf16.mxu0 0
      %1879 = vmatpush1.bf16.msra.mxu0 %v1770
      %1880 = vmatprep.subr.bf16.mxu0 0
      %1881 = vmatpush1.bf16.msra.mxu0 %v1769
      %1882 = vmatprep.subr.bf16.mxu0 0
      %1883 = vmatpush1.bf16.msra.mxu0 %v1768
      %1884 = vmatprep.subr.bf16.mxu0 0
      %1885 = vmatpush1.bf16.msra.mxu0 %v1767
      %1886 = vmatprep.subr.bf16.mxu0 0
      %1887 = vmatpush1.bf16.msra.mxu0 %v1766
      %1888 = vmatprep.subr.bf16.mxu0 0
      %1889 = vmatpush1.bf16.msra.mxu0 %v1765
      %1890 = vmatprep.subr.bf16.mxu0 0
      %1891 = vmatpush1.bf16.msra.mxu0 %v1764
      %1892 = vmatprep.subr.bf16.mxu0 0
      %1893 = vmatpush2.bf16.msra.mxu0 %v1779
      %1894 = vmatprep.subr.bf16.mxu0 0
      %1895 = vmatpush2.bf16.msra.mxu0 %v1778
      %1896 = vmatprep.subr.bf16.mxu0 0
      %1897 = vmatpush2.bf16.msra.mxu0 %v1777
      %1898 = vmatprep.subr.bf16.mxu0 0
      %1899 = vmatpush2.bf16.msra.mxu0 %v1776
      %1900 = vmatprep.subr.bf16.mxu0 0
      %1901 = vmatpush2.bf16.msra.mxu0 %v1775
      %1902 = vmatprep.subr.bf16.mxu0 0
      %1903 = vmatpush2.bf16.msra.mxu0 %v1774
      %1904 = vmatprep.subr.bf16.mxu0 0
      %1905 = vmatpush2.bf16.msra.mxu0 %v1773
      %1906 = vmatprep.subr.bf16.mxu0 0
      %1907 = vmatpush2.bf16.msra.mxu0 %v1772
      %1908 = vmatprep.mubr.bf16.mxu0 %v1387
      %1909 = vmatmul.mubr.bf16.gmra.mxu0 %v1374
      %v1910 = vpop.f32.mrf.mxu0
      %v1911 = vadd.f32 %v1538, %v1910
      %v1912 = vpop.f32.mrf.mxu0
      %v1913 = vpop.f32.mrf.mxu0
      %v1914 = vadd.f32 %v1538, %v1913
      %v1915 = vpop.f32.mrf.mxu0
      %1916 = vdwg.mxu0
      %1917 = vmatprep.subr.bf16.mxu0 0
      %1918 = vmatpush1.bf16.msra.mxu0 %v1787
      %1919 = vmatprep.subr.bf16.mxu0 0
      %1920 = vmatpush1.bf16.msra.mxu0 %v1786
      %1921 = vmatprep.subr.bf16.mxu0 0
      %1922 = vmatpush1.bf16.msra.mxu0 %v1785
      %1923 = vmatprep.subr.bf16.mxu0 0
      %1924 = vmatpush1.bf16.msra.mxu0 %v1784
      %1925 = vmatprep.subr.bf16.mxu0 0
      %1926 = vmatpush1.bf16.msra.mxu0 %v1783
      %1927 = vmatprep.subr.bf16.mxu0 0
      %1928 = vmatpush1.bf16.msra.mxu0 %v1782
      %1929 = vmatprep.subr.bf16.mxu0 0
      %1930 = vmatpush1.bf16.msra.mxu0 %v1781
      %1931 = vmatprep.subr.bf16.mxu0 0
      %1932 = vmatpush1.bf16.msra.mxu0 %v1780
      %1933 = vmatprep.subr.bf16.mxu0 0
      %1934 = vmatpush2.bf16.msra.mxu0 %v1795
      %1935 = vmatprep.subr.bf16.mxu0 0
      %1936 = vmatpush2.bf16.msra.mxu0 %v1794
      %1937 = vmatprep.subr.bf16.mxu0 0
      %1938 = vmatpush2.bf16.msra.mxu0 %v1793
      %1939 = vmatprep.subr.bf16.mxu0 0
      %1940 = vmatpush2.bf16.msra.mxu0 %v1792
      %1941 = vmatprep.subr.bf16.mxu0 0
      %1942 = vmatpush2.bf16.msra.mxu0 %v1791
      %1943 = vmatprep.subr.bf16.mxu0 0
      %1944 = vmatpush2.bf16.msra.mxu0 %v1790
      %1945 = vmatprep.subr.bf16.mxu0 0
      %1946 = vmatpush2.bf16.msra.mxu0 %v1789
      %1947 = vmatprep.subr.bf16.mxu0 0
      %1948 = vmatpush2.bf16.msra.mxu0 %v1788
      %1949 = vmatprep.mubr.bf16.mxu0 %v1403
      %1950 = vmatmul.mubr.bf16.gmra.mxu0 %v1393
      %v1951 = vpop.f32.mrf.mxu0
      %v1952 = vadd.f32 %v1911, %v1951
      %v1953 = vpop.f32.mrf.mxu0
      %v1954 = vpop.f32.mrf.mxu0
      %v1955 = vadd.f32 %v1914, %v1954
      %v1956 = vpop.f32.mrf.mxu0
      %1957 = vdwg.mxu0
      %1958 = vmatprep.subr.bf16.mxu0 0
      %1959 = vmatpush1.bf16.msra.mxu0 %v1803
      %1960 = vmatprep.subr.bf16.mxu0 0
      %1961 = vmatpush1.bf16.msra.mxu0 %v1802
      %1962 = vmatprep.subr.bf16.mxu0 0
      %1963 = vmatpush1.bf16.msra.mxu0 %v1801
      %1964 = vmatprep.subr.bf16.mxu0 0
      %1965 = vmatpush1.bf16.msra.mxu0 %v1800
      %1966 = vmatprep.subr.bf16.mxu0 0
      %1967 = vmatpush1.bf16.msra.mxu0 %v1799
      %1968 = vmatprep.subr.bf16.mxu0 0
      %1969 = vmatpush1.bf16.msra.mxu0 %v1798
      %1970 = vmatprep.subr.bf16.mxu0 0
      %1971 = vmatpush1.bf16.msra.mxu0 %v1797
      %1972 = vmatprep.subr.bf16.mxu0 0
      %1973 = vmatpush1.bf16.msra.mxu0 %v1796
      %1974 = vmatprep.subr.bf16.mxu0 0
      %1975 = vmatpush2.bf16.msra.mxu0 %v1811
      %1976 = vmatprep.subr.bf16.mxu0 0
      %1977 = vmatpush2.bf16.msra.mxu0 %v1810
      %1978 = vmatprep.subr.bf16.mxu0 0
      %1979 = vmatpush2.bf16.msra.mxu0 %v1809
      %1980 = vmatprep.subr.bf16.mxu0 0
      %1981 = vmatpush2.bf16.msra.mxu0 %v1808
      %1982 = vmatprep.subr.bf16.mxu0 0
      %1983 = vmatpush2.bf16.msra.mxu0 %v1807
      %1984 = vmatprep.subr.bf16.mxu0 0
      %1985 = vmatpush2.bf16.msra.mxu0 %v1806
      %1986 = vmatprep.subr.bf16.mxu0 0
      %1987 = vmatpush2.bf16.msra.mxu0 %v1805
      %1988 = vmatprep.subr.bf16.mxu0 0
      %1989 = vmatpush2.bf16.msra.mxu0 %v1804
      %1990 = vmatprep.mubr.bf16.mxu0 %v1415
      %1991 = vmatmul.mubr.bf16.gmra.mxu0 %v1407
      %v1992 = vpop.f32.mrf.mxu0
      %v1993 = vadd.f32 %v1952, %v1992
      %v1994 = vpop.f32.mrf.mxu0
      %v1995 = vpop.f32.mrf.mxu0
      %v1996 = vadd.f32 %v1955, %v1995
      %v1997 = vpop.f32.mrf.mxu0
      %1998 = vdwg.mxu0
      %1999 = vmatprep.subr.bf16.mxu0 0
      %2000 = vmatpush1.bf16.msra.mxu0 %v1819
      %2001 = vmatprep.subr.bf16.mxu0 0
      %2002 = vmatpush1.bf16.msra.mxu0 %v1818
      %2003 = vmatprep.subr.bf16.mxu0 0
      %2004 = vmatpush1.bf16.msra.mxu0 %v1817
      %2005 = vmatprep.subr.bf16.mxu0 0
      %2006 = vmatpush1.bf16.msra.mxu0 %v1816
      %2007 = vmatprep.subr.bf16.mxu0 0
      %2008 = vmatpush1.bf16.msra.mxu0 %v1815
      %2009 = vmatprep.subr.bf16.mxu0 0
      %2010 = vmatpush1.bf16.msra.mxu0 %v1814
      %2011 = vmatprep.subr.bf16.mxu0 0
      %2012 = vmatpush1.bf16.msra.mxu0 %v1813
      %2013 = vmatprep.subr.bf16.mxu0 0
      %2014 = vmatpush1.bf16.msra.mxu0 %v1812
      %2015 = vmatprep.subr.bf16.mxu0 0
      %2016 = vmatpush2.bf16.msra.mxu0 0
      %2017 = vmatprep.subr.bf16.mxu0 0
      %2018 = vmatpush2.bf16.msra.mxu0 0
      %2019 = vmatprep.subr.bf16.mxu0 0
      %2020 = vmatpush2.bf16.msra.mxu0 0
      %2021 = vmatprep.subr.bf16.mxu0 0
      %2022 = vmatpush2.bf16.msra.mxu0 0
      %2023 = vmatprep.subr.bf16.mxu0 0
      %2024 = vmatpush2.bf16.msra.mxu0 0
      %2025 = vmatprep.subr.bf16.mxu0 0
      %2026 = vmatpush2.bf16.msra.mxu0 0
      %2027 = vmatprep.subr.bf16.mxu0 0
      %2028 = vmatpush2.bf16.msra.mxu0 0
      %2029 = vmatprep.subr.bf16.mxu0 0
      %2030 = vmatpush2.bf16.msra.mxu0 0
      %2031 = vmatprep.mubr.bf16.mxu0 0
      %2032 = vmatmul.mubr.bf16.gmra.mxu0 %v1419
      %v2033 = vpop.f32.mrf.mxu0
      %v2034 = vadd.f32 %v1993, %v2033
      %v2035 = vpop.f32.mrf.mxu0
      %v2036 = vpop.f32.mrf.mxu0
      %v2037 = vadd.f32 %v1996, %v2036
      %v2038 = vpop.f32.mrf.mxu0
      %2039 = vdwg.mxu0
      %v2040 = vmax.f32 %v2034, 0.0
      %v2041 = vmax.f32 %v2037, 0.0
      %v2042 = vpack.c.bf16 %v1372, %v1370
      %v2043 = vpack.c.bf16 %v1373, %v1371
      %v2044 = vld [vmem:[%s7] sm:$0xf]
      %v2045 = vld [vmem:[%s7 + $0x4] sm:$0xf]
      %v2046 = vld [vmem:[%s7 + $0x8] sm:$0xf]
      %v2047 = vld [vmem:[%s7 + $0xc] sm:$0xf]
      %v2048 = vld [vmem:[%s7 + $0x10] sm:$0xf]
      %v2049 = vld [vmem:[%s7 + $0x14] sm:$0xf]
      %v2050 = vld [vmem:[%s7 + $0x18] sm:$0xf]
      %v2051 = vld [vmem:[%s7 + $0x1c] sm:$0xf]
      %v2052 = vld [vmem:[%s7 + $0x20] sm:$0xf]
      %v2053 = vld [vmem:[%s7 + $0x24] sm:$0xf]
      %v2054 = vld [vmem:[%s7 + $0x28] sm:$0xf]
      %v2055 = vld [vmem:[%s7 + $0x2c] sm:$0xf]
      %v2056 = vld [vmem:[%s7 + $0x30] sm:$0xf]
      %v2057 = vld [vmem:[%s7 + $0x34] sm:$0xf]
      %v2058 = vld [vmem:[%s7 + $0x38] sm:$0xf]
      %v2059 = vld [vmem:[%s7 + $0x3c] sm:$0xf]
      %v2060 = vld [vmem:[%s7 + $0x40] sm:$0xf]
      %v2061 = vld [vmem:[%s7 + $0x44] sm:$0xf]
      %v2062 = vld [vmem:[%s7 + $0x48] sm:$0xf]
      %v2063 = vld [vmem:[%s7 + $0x4c] sm:$0xf]
      %v2064 = vld [vmem:[%s7 + $0x50] sm:$0xf]
      %v2065 = vld [vmem:[%s7 + $0x54] sm:$0xf]
      %v2066 = vld [vmem:[%s8] sm:$0x1]
      %v2068 = vlaneseq
      %v2069 = vshrl.u32 %v2068, 7
      %v2070 = vsub.s32 0, %v2069
      %v2071 = vrot.slane %v2066, %v2070
      %v2095 = vunpack.c.l.b16 %v2044
      %v2096 = vunpack.c.l.b16 %v2045
      %v2097 = vunpack.c.l.b16 %v2046
      %v2098 = vunpack.c.l.b16 %v2047
      %v2099 = vunpack.c.l.b16 %v2048
      %v2100 = vunpack.c.l.b16 %v2049
      %v2101 = vunpack.c.l.b16 %v2050
      %v2102 = vunpack.c.l.b16 %v2051
      %v2103 = vunpack.c.l.b16 %v2052
      %v2104 = vunpack.c.l.b16 %v2053
      %v2105 = vunpack.c.l.b16 %v2054
      %v2106 = vunpack.c.l.b16 %v2055
      %v2107 = vunpack.c.l.b16 %v2056
      %v2108 = vunpack.c.l.b16 %v2057
      %v2109 = vunpack.c.l.b16 %v2058
      %v2110 = vunpack.c.l.b16 %v2059
      %v2111 = vunpack.c.l.b16 %v2060
      %v2112 = vunpack.c.l.b16 %v2061
      %v2113 = vunpack.c.l.b16 %v2062
      %v2114 = vunpack.c.l.b16 %v2063
      %v2115 = vunpack.c.l.b16 %v2064
      %v2116 = vunpack.c.l.b16 %v2065
      %v2117 = vpack.c.b16 %v2096, %v2095
      %v2118 = vpack.c.b16 %v2098, %v2097
      %v2119 = vpack.c.b16 %v2100, %v2099
      %v2120 = vpack.c.b16 %v2102, %v2101
      %v2121 = vpack.c.b16 %v2104, %v2103
      %v2122 = vpack.c.b16 %v2106, %v2105
      %v2123 = vpack.c.b16 %v2108, %v2107
      %v2124 = vpack.c.b16 %v2110, %v2109
      %v2125 = vpack.c.b16 %v2112, %v2111
      %v2126 = vpack.c.b16 %v2114, %v2113
      %v2127 = vpack.c.b16 %v2116, %v2115
      %vm2139 = vcmask 392192
      %v2141 = vsel %vm2139, %v2043, 0
      %2143 = vmatprep.subr.bf16.mxu0 0
      %2144 = vmatpush1.bf16.msra.mxu0 %v2124
      %2145 = vmatprep.subr.bf16.mxu0 0
      %2146 = vmatpush1.bf16.msra.mxu0 %v2123
      %2147 = vmatprep.subr.bf16.mxu0 0
      %2148 = vmatpush1.bf16.msra.mxu0 %v2122
      %2149 = vmatprep.subr.bf16.mxu0 0
      %2150 = vmatpush1.bf16.msra.mxu0 %v2121
      %2151 = vmatprep.subr.bf16.mxu0 0
      %2152 = vmatpush1.bf16.msra.mxu0 %v2120
      %2153 = vmatprep.subr.bf16.mxu0 0
      %2154 = vmatpush1.bf16.msra.mxu0 %v2119
      %2155 = vmatprep.subr.bf16.mxu0 0
      %2156 = vmatpush1.bf16.msra.mxu0 %v2118
      %2157 = vmatprep.subr.bf16.mxu0 0
      %2158 = vmatpush1.bf16.msra.mxu0 %v2117
      %2159 = vmatprep.subr.bf16.mxu0 0
      %2160 = vmatpush2.bf16.msra.mxu0 0
      %2161 = vmatprep.subr.bf16.mxu0 0
      %2162 = vmatpush2.bf16.msra.mxu0 0
      %2163 = vmatprep.subr.bf16.mxu0 0
      %2164 = vmatpush2.bf16.msra.mxu0 0
      %2165 = vmatprep.subr.bf16.mxu0 0
      %2166 = vmatpush2.bf16.msra.mxu0 0
      %2167 = vmatprep.subr.bf16.mxu0 0
      %2168 = vmatpush2.bf16.msra.mxu0 0
      %2169 = vmatprep.subr.bf16.mxu0 0
      %2170 = vmatpush2.bf16.msra.mxu0 %v2127
      %2171 = vmatprep.subr.bf16.mxu0 0
      %2172 = vmatpush2.bf16.msra.mxu0 %v2126
      %2173 = vmatprep.subr.bf16.mxu0 0
      %2174 = vmatpush2.bf16.msra.mxu0 %v2125
      %2175 = vmatprep.mubr.bf16.mxu0 %v2141
      %2176 = vmatmul.mubr.bf16.gmra.mxu0 %v2042
      %v2177 = vpop.f32.mrf.mxu0
      %v2178 = vadd.f32 %v2071, %v2177
      %v2179 = vpop.f32.mrf.mxu0
      %v2180 = vpop.f32.mrf.mxu0
      %v2181 = vadd.f32 %v2071, %v2180
      %v2182 = vpop.f32.mrf.mxu0
      %2183 = vdwg.mxu0
      %v2184 = vmax.f32 %v2178, 0.0
      %v2185 = vmax.f32 %v2181, 0.0
      %v2186 = vadd.f32 %v2184, %v2040
      %v2187 = vadd.f32 %v2185, %v2041
      %2188 = vst [vmem:[%s332] sm:$0xff] %v2186
      %2189 = vst [vmem:[%s332 + $0x8] sm:$0xff] %v2187
      %p2190 = scmp.lt.s32.totalorder %s20, 1
      %s2191 = scalar_select %p2190, %s20, 1
      %s2192 = smul.addr %s2191, 2
      %s2193 = smul.addr %s2192, 8
      %s2194 = scalar_lea.vmem %s9, %s2193
      // Predicated region
      $region57: #{gcn_block.1} parent=55 // pred_check
        %p2195 = pneg %p232
      $region58: #{gcn_block.1} parent=55 // pred_check_branch
        %2197 = sbr.rel (%p2195) target = $region60
      $region59: #{gcn_block.1} parent=55 // pred_region
        _
      $region60: #{gcn_block.1} parent=55 // pred_fallthru
        _
    $region56: #{gcn_block.1} parent=5 // pred_fallthru
      _
    %p2198 = scmp.le.s32.totalorder 2, %s15
    // Predicated region
    $region61: #{gcn_block.1} parent=5 // pred_check
      %p2199 = pneg %p2198
    $region62: #{gcn_block.1} parent=5 // pred_check_branch
      %2201 = sbr.rel (%p2199) target = $region64
    $region63: #{gcn_block.1} parent=5 // pred_region
      %s2202 = ssub.s32 %s15, 2
      // Predicated region
      $region65: #{gcn_block.1} parent=63 // pred_check
        %p2203 = pneg %p238
      $region66: #{gcn_block.1} parent=63 // pred_check_branch
        %2205 = sbr.rel (%p2203) target = $region68
      $region67: #{gcn_block.1} parent=63 // pred_region
        %p2206 = scmp.lt.s32.totalorder %s21, 1
        %s2207 = scalar_select %p2206, %s21, 1
        %s2208 = smul.addr %s2207, 2
        %s2209 = smul.addr %s2208, 8
        %s2210 = scalar_lea.vmem %s9, %s2209
      $region68: #{gcn_block.1} parent=63 // pred_fallthru
        _
    $region64: #{gcn_block.1} parent=5 // pred_fallthru
      _
  $region6: #{gcn_block.1} parent=0 // loop_footer
    %s19 = sadd.s32 1, %s15
  $region7: #{gcn_block.1} parent=0 // loop_footer_branch
    %14 = sbr.rel target = $region3
  $region8: #{gcn_block.1} parent=0 // loop_exit
    _

</llo_original>
